<compile_context>
chip_gen: v7x
topology: tpu7x:2x2x1
jax: 0.10.0
libtpu: 0.0.40
codegen_flags: <defaults>
</compile_context>

<pallas_src>
import jax
import jax.numpy as jnp
import numpy as np
from jax import lax
from jax.experimental import pallas as pl
from jax.experimental.pallas import tpu as pltpu

D_MODEL = 40
NUM_HEADS = 10
D_K = D_MODEL // NUM_HEADS          # 4
D_FF = 128
NUM_LAYERS = 6
LN_EPS = 1e-5


def _elu(v):
    # ELU(alpha=1): x if x > 0 else exp(x) - 1
    return jnp.where(v > 0, v, jnp.exp(jnp.minimum(v, 0.0)) - 1.0)


def _layer_norm(y, gamma, beta):
    mu = jnp.mean(y, axis=-1, keepdims=True)
    var = jnp.mean((y - mu) ** 2, axis=-1, keepdims=True)
    return (y - mu) * lax.rsqrt(var + LN_EPS) * gamma + beta


def encoder_kernel(mask_ref, x_ref,
                   wqkv_ref, bqkv_ref, wo_ref, bo_ref,
                   g1_ref, be1_ref,
                   wf1_ref, bf1_ref, wf2_ref, bf2_ref,
                   g2_ref, be2_ref,
                   o_ref, xs_ref):
    # mask_ref: (H*S, D) block-diagonal head mask; row h*S+s, col d is 1 iff d//D_K == h
    # xs_ref:   (S, D) VMEM scratch carrying the activation across the layer axis
    l = pl.program_id(1)

    @pl.when(l == 0)
    def _():
        xs_ref[...] = x_ref[0]

    x = xs_ref[...]                                  # (S, D)
    S, D = x.shape
    mask = mask_ref[...]                             # (H*S, D)

    # ---- multi-head self-attention (eval mode; dropout = identity) ----
    qkv = jnp.dot(x, wqkv_ref[0],
                  preferred_element_type=jnp.float32) + bqkv_ref[0]   # (S, 3D)
    q = qkv[:, :D] * (1.0 / float(np.sqrt(D_K)))      # scale folded into Q (exact: /2)
    k = qkv[:, D:2 * D]
    v = qkv[:, 2 * D:]

    # Row-stacked per-head layout: row h*S + s holds head h's query s, masked to
    # head h's feature slice. One matmul then yields all heads' score matrices.
    q_rows = jnp.concatenate([q] * NUM_HEADS, axis=0) * mask          # (H*S, D)
    scores = lax.dot_general(q_rows, k, (((1,), (1,)), ((), ())),
                             preferred_element_type=jnp.float32)      # (H*S, S)

    m = jnp.max(scores, axis=-1, keepdims=True)
    p = jnp.exp(scores - m)
    probs = p / jnp.sum(p, axis=-1, keepdims=True)                    # softmax per row

    ctx_st = jnp.dot(probs, v, preferred_element_type=jnp.float32)    # (H*S, D)
    # Merge heads: keep head h's feature slice from its own row block and sum.
    ctx_m = ctx_st * mask
    ctx = ctx_m[0:S, :]
    for h in range(1, NUM_HEADS):
        ctx = ctx + ctx_m[h * S:(h + 1) * S, :]                       # (S, D)

    attn = jnp.dot(ctx, wo_ref[0],
                   preferred_element_type=jnp.float32) + bo_ref[0]

    y = _layer_norm(x + attn, g1_ref[0], be1_ref[0])

    # ---- position-wise feed-forward ----
    hdn = _elu(jnp.dot(y, wf1_ref[0],
                       preferred_element_type=jnp.float32) + bf1_ref[0])   # (S, D_FF)
    ff = jnp.dot(hdn, wf2_ref[0],
                 preferred_element_type=jnp.float32) + bf2_ref[0]          # (S, D)
    y2 = _layer_norm(y + ff, g2_ref[0], be2_ref[0])

    xs_ref[...] = y2

    @pl.when(l == pl.num_programs(1) - 1)
    def _():
        o_ref[0] = y2


def self_attention_forward(x, params, mask):
    """x: (B, S, D_MODEL) float32."""
    (wqkv, bqkv, wo, bo, g1, be1, wf1, bf1, wf2, bf2, g2, be2) = params
    B, S, D = x.shape
    L = wqkv.shape[0]
    HS = NUM_HEADS * S

    return pl.pallas_call(
        encoder_kernel,
        out_shape=jax.ShapeDtypeStruct((B, S, D), jnp.float32),
        grid_spec=pltpu.PrefetchScalarGridSpec(
            num_scalar_prefetch=0,
            grid=(B, L),
            in_specs=[
                pl.BlockSpec((HS, D), lambda b, l: (0, 0)),            # head mask
                pl.BlockSpec((1, S, D), lambda b, l: (b, 0, 0)),        # x
                pl.BlockSpec((1, D, 3 * D), lambda b, l: (l, 0, 0)),    # wqkv
                pl.BlockSpec((1, 1, 3 * D), lambda b, l: (l, 0, 0)),    # bqkv
                pl.BlockSpec((1, D, D), lambda b, l: (l, 0, 0)),        # wo
                pl.BlockSpec((1, 1, D), lambda b, l: (l, 0, 0)),        # bo
                pl.BlockSpec((1, 1, D), lambda b, l: (l, 0, 0)),        # gamma1
                pl.BlockSpec((1, 1, D), lambda b, l: (l, 0, 0)),        # beta1
                pl.BlockSpec((1, D, D_FF), lambda b, l: (l, 0, 0)),     # wf1
                pl.BlockSpec((1, 1, D_FF), lambda b, l: (l, 0, 0)),     # bf1
                pl.BlockSpec((1, D_FF, D), lambda b, l: (l, 0, 0)),     # wf2
                pl.BlockSpec((1, 1, D), lambda b, l: (l, 0, 0)),        # bf2
                pl.BlockSpec((1, 1, D), lambda b, l: (l, 0, 0)),        # gamma2
                pl.BlockSpec((1, 1, D), lambda b, l: (l, 0, 0)),        # beta2
            ],
            out_specs=pl.BlockSpec((1, S, D), lambda b, l: (b, 0, 0)),
            scratch_shapes=[pltpu.VMEM((S, D), jnp.float32)],
        ),
        compiler_params=pltpu.CompilerParams(
            dimension_semantics=("parallel", "arbitrary")),
    )(mask, x, wqkv, bqkv, wo, bo, g1, be1, wf1, bf1, wf2, bf2, g2, be2)


def reference(x, params):
    """Pure-JAX reference of the PyTorch forward (eval mode), standard per-head form."""
    (wqkv, bqkv, wo, bo, g1, be1, wf1, bf1, wf2, bf2, g2, be2) = params
    B, S, D = x.shape
    scale = 1.0 / float(np.sqrt(D_K))
    for l in range(NUM_LAYERS):
        qkv = x @ wqkv[l] + bqkv[l]
        q, k, v = qkv[..., :D], qkv[..., D:2 * D], qkv[..., 2 * D:]
        qh = q.reshape(B, S, NUM_HEADS, D_K).transpose(0, 2, 1, 3)
        kh = k.reshape(B, S, NUM_HEADS, D_K).transpose(0, 2, 1, 3)
        vh = v.reshape(B, S, NUM_HEADS, D_K).transpose(0, 2, 1, 3)
        sc = jnp.einsum('bhqd,bhkd->bhqk', qh, kh) * scale
        pr = jax.nn.softmax(sc, axis=-1)
        ctx = jnp.einsum('bhqk,bhkd->bhqd', pr, vh)
        ctx = ctx.transpose(0, 2, 1, 3).reshape(B, S, D)
        attn = ctx @ wo[l] + bo[l]
        x = _layer_norm(x + attn, g1[l], be1[l])
        h = _elu(x @ wf1[l] + bf1[l])
        ff = h @ wf2[l] + bf2[l]
        x = _layer_norm(x + ff, g2[l], be2[l])
    return x


def build_head_mask(seq_len):
    row_head = np.arange(NUM_HEADS * seq_len) // seq_len
    col_head = np.arange(D_MODEL) // D_K
    return jnp.asarray((row_head[:, None] == col_head[None, :]).astype(np.float32))


def init_params(key):
    keys = jax.random.split(key, 12)
    D, F, L = D_MODEL, D_FF, NUM_LAYERS

    def lin(kk, fan_in, shape):
        return jax.random.normal(kk, shape, jnp.float32) * (1.0 / float(np.sqrt(fan_in)))

    wqkv = lin(keys[0], D, (L, D, 3 * D))
    bqkv = 0.02 * jax.random.normal(keys[1], (L, 1, 3 * D), jnp.float32)
    wo = lin(keys[2], D, (L, D, D))
    bo = 0.02 * jax.random.normal(keys[3], (L, 1, D), jnp.float32)
    g1 = 1.0 + 0.05 * jax.random.normal(keys[4], (L, 1, D), jnp.float32)
    be1 = 0.02 * jax.random.normal(keys[5], (L, 1, D), jnp.float32)
    wf1 = lin(keys[6], D, (L, D, F))
    bf1 = 0.02 * jax.random.normal(keys[7], (L, 1, F), jnp.float32)
    wf2 = lin(keys[8], F, (L, F, D))
    bf2 = 0.02 * jax.random.normal(keys[9], (L, 1, D), jnp.float32)
    g2 = 1.0 + 0.05 * jax.random.normal(keys[10], (L, 1, D), jnp.float32)
    be2 = 0.02 * jax.random.normal(keys[11], (L, 1, D), jnp.float32)
    return (wqkv, bqkv, wo, bo, g1, be1, wf1, bf1, wf2, bf2, g2, be2)


if __name__ == "__main__":
    B, S = 2, 16
    key = jax.random.PRNGKey(0)
    kx, kp = jax.random.split(key)
    x = jax.random.normal(kx, (B, S, D_MODEL), jnp.float32)
    params = init_params(kp)
    mask = build_head_mask(S)

    y = self_attention_forward(x, params, mask)
    y = jax.block_until_ready(y)

    y_ref = reference(x, params)
    assert y.shape == (B, S, D_MODEL), y.shape
    # Tolerance covers possible MXU bf16-pass differences between the Pallas matmuls
    # and XLA's default-precision f32 matmuls; any structural bug gives O(1) errors.
    max_err = jnp.max(jnp.abs(y - y_ref))
    assert jnp.allclose(y, y_ref, atol=3e-2, rtol=3e-2), max_err
    print("KERNEL_OK")
</pallas_src>

<mosaic_0001>
module attributes {stable_mosaic.version = 11 : i64} {
  func.func @encoder_kernel(%arg0: i32, %arg1: i32, %arg2: memref<160x40xf32, #tpu.memory_space<vmem>>, %arg3: memref<1x16x40xf32, #tpu.memory_space<vmem>>, %arg4: memref<1x40x120xf32, #tpu.memory_space<vmem>>, %arg5: memref<1x1x120xf32, #tpu.memory_space<vmem>>, %arg6: memref<1x40x40xf32, #tpu.memory_space<vmem>>, %arg7: memref<1x1x40xf32, #tpu.memory_space<vmem>>, %arg8: memref<1x1x40xf32, #tpu.memory_space<vmem>>, %arg9: memref<1x1x40xf32, #tpu.memory_space<vmem>>, %arg10: memref<1x40x128xf32, #tpu.memory_space<vmem>>, %arg11: memref<1x1x128xf32, #tpu.memory_space<vmem>>, %arg12: memref<1x128x40xf32, #tpu.memory_space<vmem>>, %arg13: memref<1x1x40xf32, #tpu.memory_space<vmem>>, %arg14: memref<1x1x40xf32, #tpu.memory_space<vmem>>, %arg15: memref<1x1x40xf32, #tpu.memory_space<vmem>>, %arg16: memref<1x16x40xf32, #tpu.memory_space<vmem>>, %arg17: memref<16x40xf32, #tpu.memory_space<vmem>>) attributes {dimension_semantics = [#tpu.dimension_semantics<parallel>, #tpu.dimension_semantics<arbitrary>], iteration_bounds = array<i64: 2, 6>, scalar_prefetch = 0 : i64, scratch_operands = 1 : i64, tpu.core_type = #tpu.core_type<tc>, window_params = [{pipeline_mode = #tpu.pipeline_mode<synchronous>, transform_indices = @transform_0, window_bounds = array<i64: 160, 40>}, {transform_indices = @transform_1, window_bounds = array<i64: 1, 16, 40>}, {transform_indices = @transform_2, window_bounds = array<i64: 1, 40, 120>}, {transform_indices = @transform_3, window_bounds = array<i64: 1, 1, 120>}, {transform_indices = @transform_4, window_bounds = array<i64: 1, 40, 40>}, {transform_indices = @transform_5, window_bounds = array<i64: 1, 1, 40>}, {transform_indices = @transform_6, window_bounds = array<i64: 1, 1, 40>}, {transform_indices = @transform_7, window_bounds = array<i64: 1, 1, 40>}, {transform_indices = @transform_8, window_bounds = array<i64: 1, 40, 128>}, {transform_indices = @transform_9, window_bounds = array<i64: 1, 1, 128>}, {transform_indices = @transform_10, window_bounds = array<i64: 1, 128, 40>}, {transform_indices = @transform_11, window_bounds = array<i64: 1, 1, 40>}, {transform_indices = @transform_12, window_bounds = array<i64: 1, 1, 40>}, {transform_indices = @transform_13, window_bounds = array<i64: 1, 1, 40>}, {transform_indices = @transform_14, window_bounds = array<i64: 1, 16, 40>}]} {
    %c0_i32 = arith.constant 0 : i32
    %0 = arith.cmpi eq, %arg1, %c0_i32 : i32
    %1 = arith.extui %0 : i1 to i32
    %c0_i32_0 = arith.constant 0 : i32
    %2 = arith.cmpi ne, %1, %c0_i32_0 : i32
    scf.if %2 {
      %c0_64 = arith.constant 0 : index
      %c0_65 = arith.constant 0 : index
      %c0_66 = arith.constant 0 : index
      %137 = vector.load %arg3[%c0_64, %c0_65, %c0_66] : memref<1x16x40xf32, #tpu.memory_space<vmem>>, vector<1x16x40xf32>
      %138 = vector.shape_cast %137 : vector<1x16x40xf32> to vector<16x40xf32>
      %c0_67 = arith.constant 0 : index
      %c0_68 = arith.constant 0 : index
      %139 = vector.load %arg17[%c0_67, %c0_68] : memref<16x40xf32, #tpu.memory_space<vmem>>, vector<16x40xf32>
      tpu.vector_store %arg17[%c0_67, %c0_68], %138 {strides = array<i32>} : memref<16x40xf32, #tpu.memory_space<vmem>>, vector<16x40xf32>,
    } else {
    }
    %c0 = arith.constant 0 : index
    %c0_1 = arith.constant 0 : index
    %3 = vector.load %arg17[%c0, %c0_1] : memref<16x40xf32, #tpu.memory_space<vmem>>, vector<16x40xf32>
    %c0_2 = arith.constant 0 : index
    %c0_3 = arith.constant 0 : index
    %4 = vector.load %arg2[%c0_2, %c0_3] : memref<160x40xf32, #tpu.memory_space<vmem>>, vector<160x40xf32>
    %c0_4 = arith.constant 0 : index
    %c0_5 = arith.constant 0 : index
    %c0_6 = arith.constant 0 : index
    %5 = vector.load %arg4[%c0_4, %c0_5, %c0_6] : memref<1x40x120xf32, #tpu.memory_space<vmem>>, vector<1x40x120xf32>
    %6 = vector.shape_cast %5 : vector<1x40x120xf32> to vector<40x120xf32>
    %cst = arith.constant dense<0.000000e+00> : vector<16x120xf32>
    %7 = tpu.matmul %3, %6, %cst {dimension_numbers = #tpu.dot_dimension_numbers<[1], [0], [0], [1], [0, 0, 1, 1], [], []>} : vector<16x40xf32>, vector<40x120xf32>, vector<16x120xf32> -> vector<16x120xf32>
    %c0_7 = arith.constant 0 : index
    %c0_8 = arith.constant 0 : index
    %c0_9 = arith.constant 0 : index
    %8 = vector.load %arg5[%c0_7, %c0_8, %c0_9] : memref<1x1x120xf32, #tpu.memory_space<vmem>>, vector<1x1x120xf32>
    %9 = vector.shape_cast %8 : vector<1x1x120xf32> to vector<1x120xf32>
    %10 = vector.broadcast %9 : vector<1x120xf32> to vector<16x120xf32>
    %11 = arith.addf %7, %10 : vector<16x120xf32>
    %12 = vector.extract_strided_slice %11 {offsets = [0, 0], sizes = [16, 40], strides = [1, 1]} : vector<16x120xf32> to vector<16x40xf32>
    %cst_10 = arith.constant 5.000000e-01 : f32
    %13 = vector.broadcast %cst_10 : f32 to vector<16x40xf32>
    %14 = arith.mulf %12, %13 : vector<16x40xf32>
    %15 = vector.extract_strided_slice %11 {offsets = [0, 40], sizes = [16, 40], strides = [1, 1]} : vector<16x120xf32> to vector<16x40xf32>
    %16 = vector.extract_strided_slice %11 {offsets = [0, 80], sizes = [16, 40], strides = [1, 1]} : vector<16x120xf32> to vector<16x40xf32>
    %17 = tpu.concatenate %14, %14, %14, %14, %14, %14, %14, %14, %14, %14 in 0 : vector<16x40xf32>, vector<16x40xf32>, vector<16x40xf32>, vector<16x40xf32>, vector<16x40xf32>, vector<16x40xf32>, vector<16x40xf32>, vector<16x40xf32>, vector<16x40xf32>, vector<16x40xf32> -> vector<160x40xf32>
    %18 = arith.mulf %17, %4 : vector<160x40xf32>
    %cst_11 = arith.constant dense<0.000000e+00> : vector<160x16xf32>
    %19 = tpu.matmul %18, %15, %cst_11 {dimension_numbers = #tpu.dot_dimension_numbers<[1], [1], [0], [0], [0, 0, 1, 0], [], []>} : vector<160x40xf32>, vector<16x40xf32>, vector<160x16xf32> -> vector<160x16xf32>
    %cst_12 = arith.constant dense<0xFF800000> : vector<160xf32>
    %20 = vector.multi_reduction <maximumf>, %19, %cst_12 [1] : vector<160x16xf32> to vector<160xf32>
    %21 = vector.shape_cast %20 : vector<160xf32> to vector<160x1xf32>
    %22 = vector.broadcast %21 : vector<160x1xf32> to vector<160x16xf32>
    %23 = arith.subf %19, %22 : vector<160x16xf32>
    %24 = math.exp %23 : vector<160x16xf32>
    %cst_13 = arith.constant dense<0.000000e+00> : vector<160xf32>
    %25 = vector.multi_reduction <add>, %24, %cst_13 [1] : vector<160x16xf32> to vector<160xf32>
    %26 = vector.shape_cast %25 : vector<160xf32> to vector<160x1xf32>
    %27 = vector.broadcast %26 : vector<160x1xf32> to vector<160x16xf32>
    %28 = arith.divf %24, %27 : vector<160x16xf32>
    %cst_14 = arith.constant dense<0.000000e+00> : vector<160x40xf32>
    %29 = tpu.matmul %28, %16, %cst_14 {dimension_numbers = #tpu.dot_dimension_numbers<[1], [0], [0], [1], [0, 0, 1, 1], [], []>} : vector<160x16xf32>, vector<16x40xf32>, vector<160x40xf32> -> vector<160x40xf32>
    %30 = arith.mulf %29, %4 : vector<160x40xf32>
    %31 = vector.extract_strided_slice %30 {offsets = [0, 0], sizes = [16, 40], strides = [1, 1]} : vector<160x40xf32> to vector<16x40xf32>
    %32 = vector.extract_strided_slice %30 {offsets = [16, 0], sizes = [16, 40], strides = [1, 1]} : vector<160x40xf32> to vector<16x40xf32>
    %33 = arith.addf %31, %32 : vector<16x40xf32>
    %34 = vector.extract_strided_slice %30 {offsets = [32, 0], sizes = [16, 40], strides = [1, 1]} : vector<160x40xf32> to vector<16x40xf32>
    %35 = arith.addf %33, %34 : vector<16x40xf32>
    %36 = vector.extract_strided_slice %30 {offsets = [48, 0], sizes = [16, 40], strides = [1, 1]} : vector<160x40xf32> to vector<16x40xf32>
    %37 = arith.addf %35, %36 : vector<16x40xf32>
    %38 = vector.extract_strided_slice %30 {offsets = [64, 0], sizes = [16, 40], strides = [1, 1]} : vector<160x40xf32> to vector<16x40xf32>
    %39 = arith.addf %37, %38 : vector<16x40xf32>
    %40 = vector.extract_strided_slice %30 {offsets = [80, 0], sizes = [16, 40], strides = [1, 1]} : vector<160x40xf32> to vector<16x40xf32>
    %41 = arith.addf %39, %40 : vector<16x40xf32>
    %42 = vector.extract_strided_slice %30 {offsets = [96, 0], sizes = [16, 40], strides = [1, 1]} : vector<160x40xf32> to vector<16x40xf32>
    %43 = arith.addf %41, %42 : vector<16x40xf32>
    %44 = vector.extract_strided_slice %30 {offsets = [112, 0], sizes = [16, 40], strides = [1, 1]} : vector<160x40xf32> to vector<16x40xf32>
    %45 = arith.addf %43, %44 : vector<16x40xf32>
    %46 = vector.extract_strided_slice %30 {offsets = [128, 0], sizes = [16, 40], strides = [1, 1]} : vector<160x40xf32> to vector<16x40xf32>
    %47 = arith.addf %45, %46 : vector<16x40xf32>
    %48 = vector.extract_strided_slice %30 {offsets = [144, 0], sizes = [16, 40], strides = [1, 1]} : vector<160x40xf32> to vector<16x40xf32>
    %49 = arith.addf %47, %48 : vector<16x40xf32>
    %c0_15 = arith.constant 0 : index
    %c0_16 = arith.constant 0 : index
    %c0_17 = arith.constant 0 : index
    %50 = vector.load %arg6[%c0_15, %c0_16, %c0_17] : memref<1x40x40xf32, #tpu.memory_space<vmem>>, vector<1x40x40xf32>
    %51 = vector.shape_cast %50 : vector<1x40x40xf32> to vector<40x40xf32>
    %cst_18 = arith.constant dense<0.000000e+00> : vector<16x40xf32>
    %52 = tpu.matmul %49, %51, %cst_18 {dimension_numbers = #tpu.dot_dimension_numbers<[1], [0], [0], [1], [0, 0, 1, 1], [], []>} : vector<16x40xf32>, vector<40x40xf32>, vector<16x40xf32> -> vector<16x40xf32>
    %c0_19 = arith.constant 0 : index
    %c0_20 = arith.constant 0 : index
    %c0_21 = arith.constant 0 : index
    %53 = vector.load %arg7[%c0_19, %c0_20, %c0_21] : memref<1x1x40xf32, #tpu.memory_space<vmem>>, vector<1x1x40xf32>
    %54 = vector.shape_cast %53 : vector<1x1x40xf32> to vector<1x40xf32>
    %55 = vector.broadcast %54 : vector<1x40xf32> to vector<16x40xf32>
    %56 = arith.addf %52, %55 : vector<16x40xf32>
    %57 = arith.addf %3, %56 : vector<16x40xf32>
    %c0_22 = arith.constant 0 : index
    %c0_23 = arith.constant 0 : index
    %c0_24 = arith.constant 0 : index
    %58 = vector.load %arg8[%c0_22, %c0_23, %c0_24] : memref<1x1x40xf32, #tpu.memory_space<vmem>>, vector<1x1x40xf32>
    %59 = vector.shape_cast %58 : vector<1x1x40xf32> to vector<1x40xf32>
    %c0_25 = arith.constant 0 : index
    %c0_26 = arith.constant 0 : index
    %c0_27 = arith.constant 0 : index
    %60 = vector.load %arg9[%c0_25, %c0_26, %c0_27] : memref<1x1x40xf32, #tpu.memory_space<vmem>>, vector<1x1x40xf32>
    %61 = vector.shape_cast %60 : vector<1x1x40xf32> to vector<1x40xf32>
    %cst_28 = arith.constant dense<0.000000e+00> : vector<16xf32>
    %62 = vector.multi_reduction <add>, %57, %cst_28 [1] : vector<16x40xf32> to vector<16xf32>
    %63 = vector.shape_cast %62 : vector<16xf32> to vector<16x1xf32>
    %cst_29 = arith.constant 4.000000e+01 : f32
    %64 = vector.broadcast %cst_29 : f32 to vector<16x1xf32>
    %65 = arith.divf %63, %64 : vector<16x1xf32>
    %66 = vector.broadcast %65 : vector<16x1xf32> to vector<16x40xf32>
    %67 = arith.subf %57, %66 : vector<16x40xf32>
    %68 = arith.mulf %67, %67 : vector<16x40xf32>
    %cst_30 = arith.constant dense<0.000000e+00> : vector<16xf32>
    %69 = vector.multi_reduction <add>, %68, %cst_30 [1] : vector<16x40xf32> to vector<16xf32>
    %70 = vector.shape_cast %69 : vector<16xf32> to vector<16x1xf32>
    %cst_31 = arith.constant 4.000000e+01 : f32
    %71 = vector.broadcast %cst_31 : f32 to vector<16x1xf32>
    %72 = arith.divf %70, %71 : vector<16x1xf32>
    %73 = vector.broadcast %65 : vector<16x1xf32> to vector<16x40xf32>
    %74 = arith.subf %57, %73 : vector<16x40xf32>
    %cst_32 = arith.constant 9.99999974E-6 : f32
    %75 = vector.broadcast %cst_32 : f32 to vector<16x1xf32>
    %76 = arith.addf %72, %75 : vector<16x1xf32>
    %77 = math.rsqrt %76 : vector<16x1xf32>
    %78 = vector.broadcast %77 : vector<16x1xf32> to vector<16x40xf32>
    %79 = arith.mulf %74, %78 : vector<16x40xf32>
    %80 = vector.broadcast %59 : vector<1x40xf32> to vector<16x40xf32>
    %81 = arith.mulf %79, %80 : vector<16x40xf32>
    %82 = vector.broadcast %61 : vector<1x40xf32> to vector<16x40xf32>
    %83 = arith.addf %81, %82 : vector<16x40xf32>
    %c0_33 = arith.constant 0 : index
    %c0_34 = arith.constant 0 : index
    %c0_35 = arith.constant 0 : index
    %84 = vector.load %arg10[%c0_33, %c0_34, %c0_35] : memref<1x40x128xf32, #tpu.memory_space<vmem>>, vector<1x40x128xf32>
    %85 = vector.shape_cast %84 : vector<1x40x128xf32> to vector<40x128xf32>
    %cst_36 = arith.constant dense<0.000000e+00> : vector<16x128xf32>
    %86 = tpu.matmul %83, %85, %cst_36 {dimension_numbers = #tpu.dot_dimension_numbers<[1], [0], [0], [1], [0, 0, 1, 1], [], []>} : vector<16x40xf32>, vector<40x128xf32>, vector<16x128xf32> -> vector<16x128xf32>
    %c0_37 = arith.constant 0 : index
    %c0_38 = arith.constant 0 : index
    %c0_39 = arith.constant 0 : index
    %87 = vector.load %arg11[%c0_37, %c0_38, %c0_39] : memref<1x1x128xf32, #tpu.memory_space<vmem>>, vector<1x1x128xf32>
    %88 = vector.shape_cast %87 : vector<1x1x128xf32> to vector<1x128xf32>
    %89 = vector.broadcast %88 : vector<1x128xf32> to vector<16x128xf32>
    %90 = arith.addf %86, %89 : vector<16x128xf32>
    %cst_40 = arith.constant 0.000000e+00 : f32
    %91 = vector.broadcast %cst_40 : f32 to vector<16x128xf32>
    %92 = arith.cmpf ogt, %90, %91 : vector<16x128xf32>
    %cst_41 = arith.constant 0.000000e+00 : f32
    %93 = vector.broadcast %cst_41 : f32 to vector<16x128xf32>
    %94 = arith.minimumf %90, %93 : vector<16x128xf32>
    %95 = math.exp %94 : vector<16x128xf32>
    %cst_42 = arith.constant 1.000000e+00 : f32
    %96 = vector.broadcast %cst_42 : f32 to vector<16x128xf32>
    %97 = arith.subf %95, %96 : vector<16x128xf32>
    %98 = arith.select %92, %90, %97 : vector<16x128xi1>, vector<16x128xf32>
    %c0_43 = arith.constant 0 : index
    %c0_44 = arith.constant 0 : index
    %c0_45 = arith.constant 0 : index
    %99 = vector.load %arg12[%c0_43, %c0_44, %c0_45] : memref<1x128x40xf32, #tpu.memory_space<vmem>>, vector<1x128x40xf32>
    %100 = vector.shape_cast %99 : vector<1x128x40xf32> to vector<128x40xf32>
    %cst_46 = arith.constant dense<0.000000e+00> : vector<16x40xf32>
    %101 = tpu.matmul %98, %100, %cst_46 {dimension_numbers = #tpu.dot_dimension_numbers<[1], [0], [0], [1], [0, 0, 1, 1], [], []>} : vector<16x128xf32>, vector<128x40xf32>, vector<16x40xf32> -> vector<16x40xf32>
    %c0_47 = arith.constant 0 : index
    %c0_48 = arith.constant 0 : index
    %c0_49 = arith.constant 0 : index
    %102 = vector.load %arg13[%c0_47, %c0_48, %c0_49] : memref<1x1x40xf32, #tpu.memory_space<vmem>>, vector<1x1x40xf32>
    %103 = vector.shape_cast %102 : vector<1x1x40xf32> to vector<1x40xf32>
    %104 = vector.broadcast %103 : vector<1x40xf32> to vector<16x40xf32>
    %105 = arith.addf %101, %104 : vector<16x40xf32>
    %106 = arith.addf %83, %105 : vector<16x40xf32>
    %c0_50 = arith.constant 0 : index
    %c0_51 = arith.constant 0 : index
    %c0_52 = arith.constant 0 : index
    %107 = vector.load %arg14[%c0_50, %c0_51, %c0_52] : memref<1x1x40xf32, #tpu.memory_space<vmem>>, vector<1x1x40xf32>
    %108 = vector.shape_cast %107 : vector<1x1x40xf32> to vector<1x40xf32>
    %c0_53 = arith.constant 0 : index
    %c0_54 = arith.constant 0 : index
    %c0_55 = arith.constant 0 : index
    %109 = vector.load %arg15[%c0_53, %c0_54, %c0_55] : memref<1x1x40xf32, #tpu.memory_space<vmem>>, vector<1x1x40xf32>
    %110 = vector.shape_cast %109 : vector<1x1x40xf32> to vector<1x40xf32>
    %cst_56 = arith.constant dense<0.000000e+00> : vector<16xf32>
    %111 = vector.multi_reduction <add>, %106, %cst_56 [1] : vector<16x40xf32> to vector<16xf32>
    %112 = vector.shape_cast %111 : vector<16xf32> to vector<16x1xf32>
    %cst_57 = arith.constant 4.000000e+01 : f32
    %113 = vector.broadcast %cst_57 : f32 to vector<16x1xf32>
    %114 = arith.divf %112, %113 : vector<16x1xf32>
    %115 = vector.broadcast %114 : vector<16x1xf32> to vector<16x40xf32>
    %116 = arith.subf %106, %115 : vector<16x40xf32>
    %117 = arith.mulf %116, %116 : vector<16x40xf32>
    %cst_58 = arith.constant dense<0.000000e+00> : vector<16xf32>
    %118 = vector.multi_reduction <add>, %117, %cst_58 [1] : vector<16x40xf32> to vector<16xf32>
    %119 = vector.shape_cast %118 : vector<16xf32> to vector<16x1xf32>
    %cst_59 = arith.constant 4.000000e+01 : f32
    %120 = vector.broadcast %cst_59 : f32 to vector<16x1xf32>
    %121 = arith.divf %119, %120 : vector<16x1xf32>
    %122 = vector.broadcast %114 : vector<16x1xf32> to vector<16x40xf32>
    %123 = arith.subf %106, %122 : vector<16x40xf32>
    %cst_60 = arith.constant 9.99999974E-6 : f32
    %124 = vector.broadcast %cst_60 : f32 to vector<16x1xf32>
    %125 = arith.addf %121, %124 : vector<16x1xf32>
    %126 = math.rsqrt %125 : vector<16x1xf32>
    %127 = vector.broadcast %126 : vector<16x1xf32> to vector<16x40xf32>
    %128 = arith.mulf %123, %127 : vector<16x40xf32>
    %129 = vector.broadcast %108 : vector<1x40xf32> to vector<16x40xf32>
    %130 = arith.mulf %128, %129 : vector<16x40xf32>
    %131 = vector.broadcast %110 : vector<1x40xf32> to vector<16x40xf32>
    %132 = arith.addf %130, %131 : vector<16x40xf32>
    %c0_61 = arith.constant 0 : index
    %c0_62 = arith.constant 0 : index
    %133 = vector.load %arg17[%c0_61, %c0_62] : memref<16x40xf32, #tpu.memory_space<vmem>>, vector<16x40xf32>
    tpu.vector_store %arg17[%c0_61, %c0_62], %132 {strides = array<i32>} : memref<16x40xf32, #tpu.memory_space<vmem>>, vector<16x40xf32>,
    %c5_i32 = arith.constant 5 : i32
    %134 = arith.cmpi eq, %arg1, %c5_i32 : i32
    %135 = arith.extui %134 : i1 to i32
    %c0_i32_63 = arith.constant 0 : i32
    %136 = arith.cmpi ne, %135, %c0_i32_63 : i32
    scf.if %136 {
      %c0_64 = arith.constant 0 : index
      %c0_65 = arith.constant 0 : index
      %c0_66 = arith.constant 0 : index
      %137 = vector.load %arg16[%c0_64, %c0_65, %c0_66] : memref<1x16x40xf32, #tpu.memory_space<vmem>>, vector<1x16x40xf32>
      %138 = vector.shape_cast %137 : vector<1x16x40xf32> to vector<16x40xf32>
      %139 = vector.shape_cast %132 : vector<16x40xf32> to vector<1x16x40xf32>
      tpu.vector_store %arg16[%c0_64, %c0_65, %c0_66], %139 {strides = array<i32>} : memref<1x16x40xf32, #tpu.memory_space<vmem>>, vector<1x16x40xf32>,
    } else {
    }
    return
  }
  func.func @transform_0(%arg0: i32, %arg1: i32) -> (i32, i32) {
    %c0_i32 = arith.constant 0 : i32
    %c0_i32_0 = arith.constant 0 : i32
    %c0_i32_1 = arith.constant 0 : i32
    return %c0_i32, %c0_i32_0 : i32, i32
  }
  func.func @transform_1(%arg0: i32, %arg1: i32) -> (i32, i32, i32) {
    %c0_i32 = arith.constant 0 : i32
    %c0_i32_0 = arith.constant 0 : i32
    %c0_i32_1 = arith.constant 0 : i32
    return %arg0, %c0_i32, %c0_i32_0 : i32, i32, i32
  }
  func.func @transform_2(%arg0: i32, %arg1: i32) -> (i32, i32, i32) {
    %c0_i32 = arith.constant 0 : i32
    %c0_i32_0 = arith.constant 0 : i32
    %c0_i32_1 = arith.constant 0 : i32
    return %arg1, %c0_i32, %c0_i32_0 : i32, i32, i32
  }
  func.func @transform_3(%arg0: i32, %arg1: i32) -> (i32, i32, i32) {
    %c0_i32 = arith.constant 0 : i32
    %c0_i32_0 = arith.constant 0 : i32
    %c0_i32_1 = arith.constant 0 : i32
    return %arg1, %c0_i32, %c0_i32_0 : i32, i32, i32
  }
  func.func @transform_4(%arg0: i32, %arg1: i32) -> (i32, i32, i32) {
    %c0_i32 = arith.constant 0 : i32
    %c0_i32_0 = arith.constant 0 : i32
    %c0_i32_1 = arith.constant 0 : i32
    return %arg1, %c0_i32, %c0_i32_0 : i32, i32, i32
  }
  func.func @transform_5(%arg0: i32, %arg1: i32) -> (i32, i32, i32) {
    %c0_i32 = arith.constant 0 : i32
    %c0_i32_0 = arith.constant 0 : i32
    %c0_i32_1 = arith.constant 0 : i32
    return %arg1, %c0_i32, %c0_i32_0 : i32, i32, i32
  }
  func.func @transform_6(%arg0: i32, %arg1: i32) -> (i32, i32, i32) {
    %c0_i32 = arith.constant 0 : i32
    %c0_i32_0 = arith.constant 0 : i32
    %c0_i32_1 = arith.constant 0 : i32
    return %arg1, %c0_i32, %c0_i32_0 : i32, i32, i32
  }
  func.func @transform_7(%arg0: i32, %arg1: i32) -> (i32, i32, i32) {
    %c0_i32 = arith.constant 0 : i32
    %c0_i32_0 = arith.constant 0 : i32
    %c0_i32_1 = arith.constant 0 : i32
    return %arg1, %c0_i32, %c0_i32_0 : i32, i32, i32
  }
  func.func @transform_8(%arg0: i32, %arg1: i32) -> (i32, i32, i32) {
    %c0_i32 = arith.constant 0 : i32
    %c0_i32_0 = arith.constant 0 : i32
    %c0_i32_1 = arith.constant 0 : i32
    return %arg1, %c0_i32, %c0_i32_0 : i32, i32, i32
  }
  func.func @transform_9(%arg0: i32, %arg1: i32) -> (i32, i32, i32) {
    %c0_i32 = arith.constant 0 : i32
    %c0_i32_0 = arith.constant 0 : i32
    %c0_i32_1 = arith.constant 0 : i32
    return %arg1, %c0_i32, %c0_i32_0 : i32, i32, i32
  }
  func.func @transform_10(%arg0: i32, %arg1: i32) -> (i32, i32, i32) {
    %c0_i32 = arith.constant 0 : i32
    %c0_i32_0 = arith.constant 0 : i32
    %c0_i32_1 = arith.constant 0 : i32
    return %arg1, %c0_i32, %c0_i32_0 : i32, i32, i32
  }
  func.func @transform_11(%arg0: i32, %arg1: i32) -> (i32, i32, i32) {
    %c0_i32 = arith.constant 0 : i32
    %c0_i32_0 = arith.constant 0 : i32
    %c0_i32_1 = arith.constant 0 : i32
    return %arg1, %c0_i32, %c0_i32_0 : i32, i32, i32
  }
  func.func @transform_12(%arg0: i32, %arg1: i32) -> (i32, i32, i32) {
    %c0_i32 = arith.constant 0 : i32
    %c0_i32_0 = arith.constant 0 : i32
    %c0_i32_1 = arith.constant 0 : i32
    return %arg1, %c0_i32, %c0_i32_0 : i32, i32, i32
  }
  func.func @transform_13(%arg0: i32, %arg1: i32) -> (i32, i32, i32) {
    %c0_i32 = arith.constant 0 : i32
    %c0_i32_0 = arith.constant 0 : i32
    %c0_i32_1 = arith.constant 0 : i32
    return %arg1, %c0_i32, %c0_i32_0 : i32, i32, i32
  }
  func.func @transform_14(%arg0: i32, %arg1: i32) -> (i32, i32, i32) {
    %c0_i32 = arith.constant 0 : i32
    %c0_i32_0 = arith.constant 0 : i32
    %c0_i32_1 = arith.constant 0 : i32
    return %arg0, %c0_i32, %c0_i32_0 : i32, i32, i32
  }
}

</mosaic_0001>

<llo_original>
// kernel: tpu_custom_call.1
$region0: #{tpu_custom_call.1}
  #allocation0 [shape = 'u32[]', space=smem, size = 0x4, offset = 0x4, fixed_abs, tag = 'smem constant byte address 0x4 - core index']
  #allocation1 [shape = 'u32[144,128]{1,0:T(1,128)}', space=vmem, size = 0x12000, scoped, tag = 'internal scratch']
  #allocation2 [shape = 'f32[16,40]{1,0:T(8,128)}', space=vmem, size = 0x2000, scoped, tag = 'scratch operand']
  %s0 = inlined_call_operand.vmem [shape: f32[160,40], index: 0, kind: input, shape index: {}]
  %s1 = inlined_call_operand.vmem [shape: f32[2,16,40], index: 1, kind: input, shape index: {}]
  %s2 = inlined_call_operand.vmem [shape: f32[6,40,120], index: 2, kind: input, shape index: {}]
  %s3 = inlined_call_operand.vmem [shape: f32[6,1,120], index: 3, kind: input, shape index: {}]
  %s4 = inlined_call_operand.vmem [shape: f32[6,40,40], index: 4, kind: input, shape index: {}]
  %s5 = inlined_call_operand.vmem [shape: f32[6,1,40], index: 5, kind: input, shape index: {}]
  %s6 = inlined_call_operand.vmem [shape: f32[6,1,40], index: 6, kind: input, shape index: {}]
  %s7 = inlined_call_operand.vmem [shape: f32[6,1,40], index: 7, kind: input, shape index: {}]
  %s8 = inlined_call_operand.vmem [shape: f32[6,40,128], index: 8, kind: input, shape index: {}]
  %s9 = inlined_call_operand.vmem [shape: f32[6,1,128], index: 9, kind: input, shape index: {}]
  %s10 = inlined_call_operand.vmem [shape: f32[6,128,40], index: 10, kind: input, shape index: {}]
  %s11 = inlined_call_operand.vmem [shape: f32[6,1,40], index: 11, kind: input, shape index: {}]
  %s12 = inlined_call_operand.vmem [shape: f32[6,1,40], index: 12, kind: input, shape index: {}]
  %s13 = inlined_call_operand.vmem [shape: f32[6,1,40], index: 13, kind: input, shape index: {}]
  %s14 = inlined_call_operand.hbm [shape: f32[2,16,40], index: 14, kind: output, shape index: {}]
  %s15 = sld [smem:[#allocation0]]
  $region97: #{tpu_custom_call.1} parent=0
    _
  %s17 = ssub.s32 1, %s15
  %s18 = scalar_select 0, %s17, %s15
  $region1: #{tpu_custom_call.1} parent=0
    #allocation3 [shape = 'u8[16384]{0}', space=vmem, size = 0x4000, scoped, tag = 'output window, operand 0']
    #allocation4 [shape = 's32[2]{0}', space=sflag, size = 0x8, scoped, tag = 'scoped memory for tpu_custom_call.1']
    %19 = vsyncpa [#allocation4], 0
    %s20 = scalar_lea.sflag [#allocation4], 1
    %21 = vsyncpa %s20, 0
    loop: start=0, step=1, limit=14
    $region2: #{tpu_custom_call.1} parent=1 // loop_pre_header
      _
    $region3: #{tpu_custom_call.1} parent=1 // loop_header
      %s23 = sphi 0, %s27
      %p24 = scmp.ge.s32.totalorder %s23, 14
      %s30 = sphi 0, %s42
      %s31 = sphi 0, %s38
      %s32 = sphi 0, %s30
      %s33 = sphi 0, %s31
      %s34 = sphi 0, %s32
      %s35 = sphi 0, %s33
      %s43 = sphi 0, %s43
      %s45 = sphi 0, %s43
      %s46 = sphi 0, %s45
      %s60 = sphi 0, %s46
      %s66 = sphi 0, %s68
      %s69 = sphi 0, %s66
      %s70 = sphi 0, %s69
      %s86 = sphi 0, %s70
      %s92 = sphi 0, %s94
      %s95 = sphi 0, %s92
      %s96 = sphi 0, %s95
      %s112 = sphi 0, %s96
      %s118 = sphi 0, %s120
      %s121 = sphi 0, %s118
      %s122 = sphi 0, %s121
      %s138 = sphi 0, %s122
      %s144 = sphi 0, %s146
      %s147 = sphi 0, %s144
      %s148 = sphi 0, %s147
      %s164 = sphi 0, %s148
      %s170 = sphi 0, %s172
      %s173 = sphi 0, %s170
      %s174 = sphi 0, %s173
      %s190 = sphi 0, %s174
      %s196 = sphi 0, %s198
      %s199 = sphi 0, %s196
      %s200 = sphi 0, %s199
      %s216 = sphi 0, %s200
      %s222 = sphi 0, %s224
      %s225 = sphi 0, %s222
      %s226 = sphi 0, %s225
      %s242 = sphi 0, %s226
      %s248 = sphi 0, %s250
      %s251 = sphi 0, %s248
      %s252 = sphi 0, %s251
      %s268 = sphi 0, %s252
      %s274 = sphi 0, %s276
      %s277 = sphi 0, %s274
      %s278 = sphi 0, %s277
      %s294 = sphi 0, %s278
      %s300 = sphi 0, %s302
      %s303 = sphi 0, %s300
      %s304 = sphi 0, %s303
      %s320 = sphi 0, %s304
      %s326 = sphi 0, %s328
      %s329 = sphi 0, %s326
      %s330 = sphi 0, %s329
      %s346 = sphi 0, %s330
      %s352 = sphi 0, %s354
      %s355 = sphi 0, %s352
      %s356 = sphi 0, %s355
      %s372 = sphi 0, %s356
      %s378 = sphi 0, %s380
      %s381 = sphi 0, %s378
      %s382 = sphi 0, %s381
      %s398 = sphi 0, %s382
      %s404 = sphi 0, %s406
      %s407 = sphi 0, %s404
      %s408 = sphi 0, %s407
      %s424 = sphi 0, %s408
    $region4: #{tpu_custom_call.1} parent=1 // loop_header_branch
      %26 = sbr.rel (%p24) target = $region8
    $region5: #{tpu_custom_call.1} parent=1 // loop_body
      %s28 = ssub.s32 %s23, 1
      %s29 = ssub.s32 %s23, 2
      %s36 = sadd.s32 1, %s31
      %p37 = scmp.ge.s32.totalorder %s36, 6
      %s38 = scalar_select %p37, 0, %s36
      %s39 = sadd.s32 1, %s30
      %s40 = scalar_select %p37, %s39, %s30
      %p41 = scmp.ge.s32.totalorder %s40, 2
      %s42 = scalar_select %p41, 0, %s40
      %s44 = sadd.s32 %s43, 1
      %p47 = scmp.eq.s32.totalorder %s23, 11
      %p48 = scmp.ne.s32.totalorder %s43, %s45
      %p49 = scmp.eq.s32.totalorder %s23, 0
      %p50 = por %p48, %p49
      %p51 = scmp.ne.s32.totalorder %s43, %s45
      %p52 = scmp.eq.s32.totalorder %s28, 11
      %p53 = por %p51, %p52
      %p54 = scmp.ne.s32.totalorder %s45, %s46
      %p55 = scmp.eq.s32.totalorder %s28, 0
      %p56 = por %p54, %p55
      %p57 = scmp.ne.s32.totalorder %s45, %s46
      %p58 = scmp.eq.s32.totalorder %s29, 11
      %p59 = por %p57, %p58
      %p61 = scmp.ne.s32.totalorder %s46, %s60
      %p62 = scmp.eq.s32.totalorder %s29, 0
      %p63 = por %p61, %p62
      %s64 = ssub.s32 %s30, %s42
      %p65 = scmp.eq.s32.totalorder %s64, 0
      %s67 = sadd.s32 %s66, 1
      %s68 = scalar_select %p65, %s66, %s67
      %p71 = pneg %p65
      %p72 = scmp.eq.s32.totalorder %s23, 11
      %p73 = por %p71, %p72
      %p74 = scmp.ne.s32.totalorder %s66, %s69
      %p75 = scmp.eq.s32.totalorder %s23, 0
      %p76 = por %p74, %p75
      %p77 = scmp.ne.s32.totalorder %s66, %s69
      %p78 = scmp.eq.s32.totalorder %s28, 11
      %p79 = por %p77, %p78
      %p80 = scmp.ne.s32.totalorder %s69, %s70
      %p81 = scmp.eq.s32.totalorder %s28, 0
      %p82 = por %p80, %p81
      %p83 = scmp.ne.s32.totalorder %s69, %s70
      %p84 = scmp.eq.s32.totalorder %s29, 11
      %p85 = por %p83, %p84
      %p87 = scmp.ne.s32.totalorder %s70, %s86
      %p88 = scmp.eq.s32.totalorder %s29, 0
      %p89 = por %p87, %p88
      %s90 = ssub.s32 %s31, %s38
      %p91 = scmp.eq.s32.totalorder %s90, 0
      %s93 = sadd.s32 %s92, 1
      %s94 = scalar_select %p91, %s92, %s93
      %p97 = pneg %p91
      %p98 = scmp.eq.s32.totalorder %s23, 11
      %p99 = por %p97, %p98
      %p100 = scmp.ne.s32.totalorder %s92, %s95
      %p101 = scmp.eq.s32.totalorder %s23, 0
      %p102 = por %p100, %p101
      %p103 = scmp.ne.s32.totalorder %s92, %s95
      %p104 = scmp.eq.s32.totalorder %s28, 11
      %p105 = por %p103, %p104
      %p106 = scmp.ne.s32.totalorder %s95, %s96
      %p107 = scmp.eq.s32.totalorder %s28, 0
      %p108 = por %p106, %p107
      %p109 = scmp.ne.s32.totalorder %s95, %s96
      %p110 = scmp.eq.s32.totalorder %s29, 11
      %p111 = por %p109, %p110
      %p113 = scmp.ne.s32.totalorder %s96, %s112
      %p114 = scmp.eq.s32.totalorder %s29, 0
      %p115 = por %p113, %p114
      %s116 = ssub.s32 %s31, %s38
      %p117 = scmp.eq.s32.totalorder %s116, 0
      %s119 = sadd.s32 %s118, 1
      %s120 = scalar_select %p117, %s118, %s119
      %p123 = pneg %p117
      %p124 = scmp.eq.s32.totalorder %s23, 11
      %p125 = por %p123, %p124
      %p126 = scmp.ne.s32.totalorder %s118, %s121
      %p127 = scmp.eq.s32.totalorder %s23, 0
      %p128 = por %p126, %p127
      %p129 = scmp.ne.s32.totalorder %s118, %s121
      %p130 = scmp.eq.s32.totalorder %s28, 11
      %p131 = por %p129, %p130
      %p132 = scmp.ne.s32.totalorder %s121, %s122
      %p133 = scmp.eq.s32.totalorder %s28, 0
      %p134 = por %p132, %p133
      %p135 = scmp.ne.s32.totalorder %s121, %s122
      %p136 = scmp.eq.s32.totalorder %s29, 11
      %p137 = por %p135, %p136
      %p139 = scmp.ne.s32.totalorder %s122, %s138
      %p140 = scmp.eq.s32.totalorder %s29, 0
      %p141 = por %p139, %p140
      %s142 = ssub.s32 %s31, %s38
      %p143 = scmp.eq.s32.totalorder %s142, 0
      %s145 = sadd.s32 %s144, 1
      %s146 = scalar_select %p143, %s144, %s145
      %p149 = pneg %p143
      %p150 = scmp.eq.s32.totalorder %s23, 11
      %p151 = por %p149, %p150
      %p152 = scmp.ne.s32.totalorder %s144, %s147
      %p153 = scmp.eq.s32.totalorder %s23, 0
      %p154 = por %p152, %p153
      %p155 = scmp.ne.s32.totalorder %s144, %s147
      %p156 = scmp.eq.s32.totalorder %s28, 11
      %p157 = por %p155, %p156
      %p158 = scmp.ne.s32.totalorder %s147, %s148
      %p159 = scmp.eq.s32.totalorder %s28, 0
      %p160 = por %p158, %p159
      %p161 = scmp.ne.s32.totalorder %s147, %s148
      %p162 = scmp.eq.s32.totalorder %s29, 11
      %p163 = por %p161, %p162
      %p165 = scmp.ne.s32.totalorder %s148, %s164
      %p166 = scmp.eq.s32.totalorder %s29, 0
      %p167 = por %p165, %p166
      %s168 = ssub.s32 %s31, %s38
      %p169 = scmp.eq.s32.totalorder %s168, 0
      %s171 = sadd.s32 %s170, 1
      %s172 = scalar_select %p169, %s170, %s171
      %p175 = pneg %p169
      %p176 = scmp.eq.s32.totalorder %s23, 11
      %p177 = por %p175, %p176
      %p178 = scmp.ne.s32.totalorder %s170, %s173
      %p179 = scmp.eq.s32.totalorder %s23, 0
      %p180 = por %p178, %p179
      %p181 = scmp.ne.s32.totalorder %s170, %s173
      %p182 = scmp.eq.s32.totalorder %s28, 11
      %p183 = por %p181, %p182
      %p184 = scmp.ne.s32.totalorder %s173, %s174
      %p185 = scmp.eq.s32.totalorder %s28, 0
      %p186 = por %p184, %p185
      %p187 = scmp.ne.s32.totalorder %s173, %s174
      %p188 = scmp.eq.s32.totalorder %s29, 11
      %p189 = por %p187, %p188
      %p191 = scmp.ne.s32.totalorder %s174, %s190
      %p192 = scmp.eq.s32.totalorder %s29, 0
      %p193 = por %p191, %p192
      %s194 = ssub.s32 %s31, %s38
      %p195 = scmp.eq.s32.totalorder %s194, 0
      %s197 = sadd.s32 %s196, 1
      %s198 = scalar_select %p195, %s196, %s197
      %p201 = pneg %p195
      %p202 = scmp.eq.s32.totalorder %s23, 11
      %p203 = por %p201, %p202
      %p204 = scmp.ne.s32.totalorder %s196, %s199
      %p205 = scmp.eq.s32.totalorder %s23, 0
      %p206 = por %p204, %p205
      %p207 = scmp.ne.s32.totalorder %s196, %s199
      %p208 = scmp.eq.s32.totalorder %s28, 11
      %p209 = por %p207, %p208
      %p210 = scmp.ne.s32.totalorder %s199, %s200
      %p211 = scmp.eq.s32.totalorder %s28, 0
      %p212 = por %p210, %p211
      %p213 = scmp.ne.s32.totalorder %s199, %s200
      %p214 = scmp.eq.s32.totalorder %s29, 11
      %p215 = por %p213, %p214
      %p217 = scmp.ne.s32.totalorder %s200, %s216
      %p218 = scmp.eq.s32.totalorder %s29, 0
      %p219 = por %p217, %p218
      %s220 = ssub.s32 %s31, %s38
      %p221 = scmp.eq.s32.totalorder %s220, 0
      %s223 = sadd.s32 %s222, 1
      %s224 = scalar_select %p221, %s222, %s223
      %p227 = pneg %p221
      %p228 = scmp.eq.s32.totalorder %s23, 11
      %p229 = por %p227, %p228
      %p230 = scmp.ne.s32.totalorder %s222, %s225
      %p231 = scmp.eq.s32.totalorder %s23, 0
      %p232 = por %p230, %p231
      %p233 = scmp.ne.s32.totalorder %s222, %s225
      %p234 = scmp.eq.s32.totalorder %s28, 11
      %p235 = por %p233, %p234
      %p236 = scmp.ne.s32.totalorder %s225, %s226
      %p237 = scmp.eq.s32.totalorder %s28, 0
      %p238 = por %p236, %p237
      %p239 = scmp.ne.s32.totalorder %s225, %s226
      %p240 = scmp.eq.s32.totalorder %s29, 11
      %p241 = por %p239, %p240
      %p243 = scmp.ne.s32.totalorder %s226, %s242
      %p244 = scmp.eq.s32.totalorder %s29, 0
      %p245 = por %p243, %p244
      %s246 = ssub.s32 %s31, %s38
      %p247 = scmp.eq.s32.totalorder %s246, 0
      %s249 = sadd.s32 %s248, 1
      %s250 = scalar_select %p247, %s248, %s249
      %p253 = pneg %p247
      %p254 = scmp.eq.s32.totalorder %s23, 11
      %p255 = por %p253, %p254
      %p256 = scmp.ne.s32.totalorder %s248, %s251
      %p257 = scmp.eq.s32.totalorder %s23, 0
      %p258 = por %p256, %p257
      %p259 = scmp.ne.s32.totalorder %s248, %s251
      %p260 = scmp.eq.s32.totalorder %s28, 11
      %p261 = por %p259, %p260
      %p262 = scmp.ne.s32.totalorder %s251, %s252
      %p263 = scmp.eq.s32.totalorder %s28, 0
      %p264 = por %p262, %p263
      %p265 = scmp.ne.s32.totalorder %s251, %s252
      %p266 = scmp.eq.s32.totalorder %s29, 11
      %p267 = por %p265, %p266
      %p269 = scmp.ne.s32.totalorder %s252, %s268
      %p270 = scmp.eq.s32.totalorder %s29, 0
      %p271 = por %p269, %p270
      %s272 = ssub.s32 %s31, %s38
      %p273 = scmp.eq.s32.totalorder %s272, 0
      %s275 = sadd.s32 %s274, 1
      %s276 = scalar_select %p273, %s274, %s275
      %p279 = pneg %p273
      %p280 = scmp.eq.s32.totalorder %s23, 11
      %p281 = por %p279, %p280
      %p282 = scmp.ne.s32.totalorder %s274, %s277
      %p283 = scmp.eq.s32.totalorder %s23, 0
      %p284 = por %p282, %p283
      %p285 = scmp.ne.s32.totalorder %s274, %s277
      %p286 = scmp.eq.s32.totalorder %s28, 11
      %p287 = por %p285, %p286
      %p288 = scmp.ne.s32.totalorder %s277, %s278
      %p289 = scmp.eq.s32.totalorder %s28, 0
      %p290 = por %p288, %p289
      %p291 = scmp.ne.s32.totalorder %s277, %s278
      %p292 = scmp.eq.s32.totalorder %s29, 11
      %p293 = por %p291, %p292
      %p295 = scmp.ne.s32.totalorder %s278, %s294
      %p296 = scmp.eq.s32.totalorder %s29, 0
      %p297 = por %p295, %p296
      %s298 = ssub.s32 %s31, %s38
      %p299 = scmp.eq.s32.totalorder %s298, 0
      %s301 = sadd.s32 %s300, 1
      %s302 = scalar_select %p299, %s300, %s301
      %p305 = pneg %p299
      %p306 = scmp.eq.s32.totalorder %s23, 11
      %p307 = por %p305, %p306
      %p308 = scmp.ne.s32.totalorder %s300, %s303
      %p309 = scmp.eq.s32.totalorder %s23, 0
      %p310 = por %p308, %p309
      %p311 = scmp.ne.s32.totalorder %s300, %s303
      %p312 = scmp.eq.s32.totalorder %s28, 11
      %p313 = por %p311, %p312
      %p314 = scmp.ne.s32.totalorder %s303, %s304
      %p315 = scmp.eq.s32.totalorder %s28, 0
      %p316 = por %p314, %p315
      %p317 = scmp.ne.s32.totalorder %s303, %s304
      %p318 = scmp.eq.s32.totalorder %s29, 11
      %p319 = por %p317, %p318
      %p321 = scmp.ne.s32.totalorder %s304, %s320
      %p322 = scmp.eq.s32.totalorder %s29, 0
      %p323 = por %p321, %p322
      %s324 = ssub.s32 %s31, %s38
      %p325 = scmp.eq.s32.totalorder %s324, 0
      %s327 = sadd.s32 %s326, 1
      %s328 = scalar_select %p325, %s326, %s327
      %p331 = pneg %p325
      %p332 = scmp.eq.s32.totalorder %s23, 11
      %p333 = por %p331, %p332
      %p334 = scmp.ne.s32.totalorder %s326, %s329
      %p335 = scmp.eq.s32.totalorder %s23, 0
      %p336 = por %p334, %p335
      %p337 = scmp.ne.s32.totalorder %s326, %s329
      %p338 = scmp.eq.s32.totalorder %s28, 11
      %p339 = por %p337, %p338
      %p340 = scmp.ne.s32.totalorder %s329, %s330
      %p341 = scmp.eq.s32.totalorder %s28, 0
      %p342 = por %p340, %p341
      %p343 = scmp.ne.s32.totalorder %s329, %s330
      %p344 = scmp.eq.s32.totalorder %s29, 11
      %p345 = por %p343, %p344
      %p347 = scmp.ne.s32.totalorder %s330, %s346
      %p348 = scmp.eq.s32.totalorder %s29, 0
      %p349 = por %p347, %p348
      %s350 = ssub.s32 %s31, %s38
      %p351 = scmp.eq.s32.totalorder %s350, 0
      %s353 = sadd.s32 %s352, 1
      %s354 = scalar_select %p351, %s352, %s353
      %p357 = pneg %p351
      %p358 = scmp.eq.s32.totalorder %s23, 11
      %p359 = por %p357, %p358
      %p360 = scmp.ne.s32.totalorder %s352, %s355
      %p361 = scmp.eq.s32.totalorder %s23, 0
      %p362 = por %p360, %p361
      %p363 = scmp.ne.s32.totalorder %s352, %s355
      %p364 = scmp.eq.s32.totalorder %s28, 11
      %p365 = por %p363, %p364
      %p366 = scmp.ne.s32.totalorder %s355, %s356
      %p367 = scmp.eq.s32.totalorder %s28, 0
      %p368 = por %p366, %p367
      %p369 = scmp.ne.s32.totalorder %s355, %s356
      %p370 = scmp.eq.s32.totalorder %s29, 11
      %p371 = por %p369, %p370
      %p373 = scmp.ne.s32.totalorder %s356, %s372
      %p374 = scmp.eq.s32.totalorder %s29, 0
      %p375 = por %p373, %p374
      %s376 = ssub.s32 %s31, %s38
      %p377 = scmp.eq.s32.totalorder %s376, 0
      %s379 = sadd.s32 %s378, 1
      %s380 = scalar_select %p377, %s378, %s379
      %p383 = pneg %p377
      %p384 = scmp.eq.s32.totalorder %s23, 11
      %p385 = por %p383, %p384
      %p386 = scmp.ne.s32.totalorder %s378, %s381
      %p387 = scmp.eq.s32.totalorder %s23, 0
      %p388 = por %p386, %p387
      %p389 = scmp.ne.s32.totalorder %s378, %s381
      %p390 = scmp.eq.s32.totalorder %s28, 11
      %p391 = por %p389, %p390
      %p392 = scmp.ne.s32.totalorder %s381, %s382
      %p393 = scmp.eq.s32.totalorder %s28, 0
      %p394 = por %p392, %p393
      %p395 = scmp.ne.s32.totalorder %s381, %s382
      %p396 = scmp.eq.s32.totalorder %s29, 11
      %p397 = por %p395, %p396
      %p399 = scmp.ne.s32.totalorder %s382, %s398
      %p400 = scmp.eq.s32.totalorder %s29, 0
      %p401 = por %p399, %p400
      %s402 = ssub.s32 %s30, %s42
      %p403 = scmp.eq.s32.totalorder %s402, 0
      %s405 = sadd.s32 %s404, 1
      %s406 = scalar_select %p403, %s404, %s405
      %p409 = pneg %p403
      %p410 = scmp.eq.s32.totalorder %s23, 11
      %p411 = por %p409, %p410
      %p412 = scmp.ne.s32.totalorder %s404, %s407
      %p413 = scmp.eq.s32.totalorder %s23, 0
      %p414 = por %p412, %p413
      %p415 = scmp.ne.s32.totalorder %s404, %s407
      %p416 = scmp.eq.s32.totalorder %s28, 11
      %p417 = por %p415, %p416
      %p418 = scmp.ne.s32.totalorder %s407, %s408
      %p419 = scmp.eq.s32.totalorder %s28, 0
      %p420 = por %p418, %p419
      %p421 = scmp.ne.s32.totalorder %s407, %s408
      %p422 = scmp.eq.s32.totalorder %s29, 11
      %p423 = por %p421, %p422
      %p425 = scmp.ne.s32.totalorder %s408, %s424
      %p426 = scmp.eq.s32.totalorder %s29, 0
      %p427 = por %p425, %p426
      %p428 = scmp.le.s32.totalorder 1, %s23
      %p429 = scmp.lt.s32.totalorder %s23, 13
      %p430 = pnand %p428, %p429
      %p431 = pneg %p430
      // Predicated region
      $region9: #{tpu_custom_call.1} parent=5 // pred_check
        _
      $region10: #{tpu_custom_call.1} parent=5 // pred_check_branch
        %433 = sbr.rel (%p430) target = $region12
      $region11: #{tpu_custom_call.1} parent=5 // pred_region
        %s434 = ssub.s32 %s23, 1
        // Predicated region
        $region13: #{tpu_custom_call.1} parent=11 // pred_check
          %p435 = pneg %p56
        $region14: #{tpu_custom_call.1} parent=11 // pred_check_branch
          %437 = sbr.rel (%p435) target = $region16
        $region15: #{tpu_custom_call.1} parent=11 // pred_region
          _
        $region16: #{tpu_custom_call.1} parent=11 // pred_fallthru
          _
      $region12: #{tpu_custom_call.1} parent=5 // pred_fallthru
        _
      %p438 = scmp.lt.s32.totalorder %s23, 12
      // Predicated region
      $region17: #{tpu_custom_call.1} parent=5 // pred_check
        %p439 = pneg %p438
      $region18: #{tpu_custom_call.1} parent=5 // pred_check_branch
        %441 = sbr.rel (%p439) target = $region20
      $region19: #{tpu_custom_call.1} parent=5 // pred_region
        // Predicated region
        $region21: #{tpu_custom_call.1} parent=19 // pred_check
          %p442 = pneg %p76
        $region22: #{tpu_custom_call.1} parent=19 // pred_check_branch
          %444 = sbr.rel (%p442) target = $region24
        $region23: #{tpu_custom_call.1} parent=19 // pred_region
          %p445 = scmp.lt.s32.totalorder %s30, 1
          %s446 = scalar_select %p445, %s30, 1
          %s447 = smul.addr %s446, 2
          %s448 = smul.addr %s447, 8
          %s449 = scalar_lea.vmem %s1, %s448
        $region24: #{tpu_custom_call.1} parent=19 // pred_fallthru
          _
        // Predicated region
        $region25: #{tpu_custom_call.1} parent=19 // pred_check
          %p450 = pneg %p102
        $region26: #{tpu_custom_call.1} parent=19 // pred_check_branch
          %452 = sbr.rel (%p450) target = $region28
        $region27: #{tpu_custom_call.1} parent=19 // pred_region
          %p453 = scmp.lt.s32.totalorder %s31, 5
          %s454 = scalar_select %p453, %s31, 5
          %s455 = smul.addr %s454, 5
          %s456 = smul.addr %s455, 8
          %s457 = scalar_lea.vmem %s2, %s456
        $region28: #{tpu_custom_call.1} parent=19 // pred_fallthru
          _
        // Predicated region
        $region29: #{tpu_custom_call.1} parent=19 // pred_check
          %p458 = pneg %p128
        $region30: #{tpu_custom_call.1} parent=19 // pred_check_branch
          %460 = sbr.rel (%p458) target = $region32
        $region31: #{tpu_custom_call.1} parent=19 // pred_region
          %p461 = scmp.lt.s32.totalorder %s31, 5
          %s462 = scalar_select %p461, %s31, 5
          %s463 = scalar_lea.vmem %s3, %s462
        $region32: #{tpu_custom_call.1} parent=19 // pred_fallthru
          _
        // Predicated region
        $region33: #{tpu_custom_call.1} parent=19 // pred_check
          %p464 = pneg %p154
        $region34: #{tpu_custom_call.1} parent=19 // pred_check_branch
          %466 = sbr.rel (%p464) target = $region36
        $region35: #{tpu_custom_call.1} parent=19 // pred_region
          %p467 = scmp.lt.s32.totalorder %s31, 5
          %s468 = scalar_select %p467, %s31, 5
          %s469 = smul.addr %s468, 5
          %s470 = smul.addr %s469, 8
          %s471 = scalar_lea.vmem %s4, %s470
        $region36: #{tpu_custom_call.1} parent=19 // pred_fallthru
          _
        // Predicated region
        $region37: #{tpu_custom_call.1} parent=19 // pred_check
          %p472 = pneg %p180
        $region38: #{tpu_custom_call.1} parent=19 // pred_check_branch
          %474 = sbr.rel (%p472) target = $region40
        $region39: #{tpu_custom_call.1} parent=19 // pred_region
          %p475 = scmp.lt.s32.totalorder %s31, 5
          %s476 = scalar_select %p475, %s31, 5
          %s477 = scalar_lea.vmem %s5, %s476
        $region40: #{tpu_custom_call.1} parent=19 // pred_fallthru
          _
        // Predicated region
        $region41: #{tpu_custom_call.1} parent=19 // pred_check
          %p478 = pneg %p206
        $region42: #{tpu_custom_call.1} parent=19 // pred_check_branch
          %480 = sbr.rel (%p478) target = $region44
        $region43: #{tpu_custom_call.1} parent=19 // pred_region
          %p481 = scmp.lt.s32.totalorder %s31, 5
          %s482 = scalar_select %p481, %s31, 5
          %s483 = scalar_lea.vmem %s6, %s482
        $region44: #{tpu_custom_call.1} parent=19 // pred_fallthru
          _
        // Predicated region
        $region45: #{tpu_custom_call.1} parent=19 // pred_check
          %p484 = pneg %p232
        $region46: #{tpu_custom_call.1} parent=19 // pred_check_branch
          %486 = sbr.rel (%p484) target = $region48
        $region47: #{tpu_custom_call.1} parent=19 // pred_region
          %p487 = scmp.lt.s32.totalorder %s31, 5
          %s488 = scalar_select %p487, %s31, 5
          %s489 = scalar_lea.vmem %s7, %s488
        $region48: #{tpu_custom_call.1} parent=19 // pred_fallthru
          _
        // Predicated region
        $region49: #{tpu_custom_call.1} parent=19 // pred_check
          %p490 = pneg %p258
        $region50: #{tpu_custom_call.1} parent=19 // pred_check_branch
          %492 = sbr.rel (%p490) target = $region52
        $region51: #{tpu_custom_call.1} parent=19 // pred_region
          %p493 = scmp.lt.s32.totalorder %s31, 5
          %s494 = scalar_select %p493, %s31, 5
          %s495 = smul.addr %s494, 5
          %s496 = smul.addr %s495, 8
          %s497 = scalar_lea.vmem %s8, %s496
        $region52: #{tpu_custom_call.1} parent=19 // pred_fallthru
          _
        // Predicated region
        $region53: #{tpu_custom_call.1} parent=19 // pred_check
          %p498 = pneg %p284
        $region54: #{tpu_custom_call.1} parent=19 // pred_check_branch
          %500 = sbr.rel (%p498) target = $region56
        $region55: #{tpu_custom_call.1} parent=19 // pred_region
          %p501 = scmp.lt.s32.totalorder %s31, 5
          %s502 = scalar_select %p501, %s31, 5
          %s503 = scalar_lea.vmem %s9, %s502
        $region56: #{tpu_custom_call.1} parent=19 // pred_fallthru
          _
        // Predicated region
        $region57: #{tpu_custom_call.1} parent=19 // pred_check
          %p504 = pneg %p310
        $region58: #{tpu_custom_call.1} parent=19 // pred_check_branch
          %506 = sbr.rel (%p504) target = $region60
        $region59: #{tpu_custom_call.1} parent=19 // pred_region
          %p507 = scmp.lt.s32.totalorder %s31, 5
          %s508 = scalar_select %p507, %s31, 5
          %s509 = smul.addr %s508, 16
          %s510 = smul.addr %s509, 8
          %s511 = scalar_lea.vmem %s10, %s510
        $region60: #{tpu_custom_call.1} parent=19 // pred_fallthru
          _
        // Predicated region
        $region61: #{tpu_custom_call.1} parent=19 // pred_check
          %p512 = pneg %p336
        $region62: #{tpu_custom_call.1} parent=19 // pred_check_branch
          %514 = sbr.rel (%p512) target = $region64
        $region63: #{tpu_custom_call.1} parent=19 // pred_region
          %p515 = scmp.lt.s32.totalorder %s31, 5
          %s516 = scalar_select %p515, %s31, 5
          %s517 = scalar_lea.vmem %s11, %s516
        $region64: #{tpu_custom_call.1} parent=19 // pred_fallthru
          _
        // Predicated region
        $region65: #{tpu_custom_call.1} parent=19 // pred_check
          %p518 = pneg %p362
        $region66: #{tpu_custom_call.1} parent=19 // pred_check_branch
          %520 = sbr.rel (%p518) target = $region68
        $region67: #{tpu_custom_call.1} parent=19 // pred_region
          %p521 = scmp.lt.s32.totalorder %s31, 5
          %s522 = scalar_select %p521, %s31, 5
          %s523 = scalar_lea.vmem %s12, %s522
        $region68: #{tpu_custom_call.1} parent=19 // pred_fallthru
          _
        // Predicated region
        $region69: #{tpu_custom_call.1} parent=19 // pred_check
          %p524 = pneg %p388
        $region70: #{tpu_custom_call.1} parent=19 // pred_check_branch
          %526 = sbr.rel (%p524) target = $region72
        $region71: #{tpu_custom_call.1} parent=19 // pred_region
          %p527 = scmp.lt.s32.totalorder %s31, 5
          %s528 = scalar_select %p527, %s31, 5
          %s529 = scalar_lea.vmem %s13, %s528
        $region72: #{tpu_custom_call.1} parent=19 // pred_fallthru
          _
      $region20: #{tpu_custom_call.1} parent=5 // pred_fallthru
        _
      %p530 = scmp.le.s32.totalorder 1, %s23
      %p531 = scmp.lt.s32.totalorder %s23, 13
      %p532 = pnand %p530, %p531
      %p533 = pneg %p532
      // Predicated region
      $region73: #{tpu_custom_call.1} parent=5 // pred_check
        _
      $region74: #{tpu_custom_call.1} parent=5 // pred_check_branch
        %535 = sbr.rel (%p532) target = $region76
      $region75: #{tpu_custom_call.1} parent=5 // pred_region
        %s536 = ssub.s32 %s23, 1
        %p537 = pneg %p56
        %p538 = pneg %p53
        %p539 = scmp.lt.s32.totalorder %s32, 1
        %s540 = scalar_select %p539, %s32, 1
        %s541 = smul.addr %s540, 2
        %s542 = smul.addr %s541, 8
        %s543 = scalar_lea.vmem %s1, %s542
        %p544 = pneg %p82
        %p545 = pneg %p79
        %p546 = scmp.lt.s32.totalorder %s33, 5
        %s547 = scalar_select %p546, %s33, 5
        %s548 = smul.addr %s547, 5
        %s549 = smul.addr %s548, 8
        %s550 = scalar_lea.vmem %s2, %s549
        %p551 = pneg %p108
        %p552 = pneg %p105
        %p553 = scmp.lt.s32.totalorder %s33, 5
        %s554 = scalar_select %p553, %s33, 5
        %s555 = scalar_lea.vmem %s3, %s554
        %p556 = pneg %p134
        %p557 = pneg %p131
        %p558 = scmp.lt.s32.totalorder %s33, 5
        %s559 = scalar_select %p558, %s33, 5
        %s560 = smul.addr %s559, 5
        %s561 = smul.addr %s560, 8
        %s562 = scalar_lea.vmem %s4, %s561
        %p563 = pneg %p160
        %p564 = pneg %p157
        %p565 = scmp.lt.s32.totalorder %s33, 5
        %s566 = scalar_select %p565, %s33, 5
        %s567 = scalar_lea.vmem %s5, %s566
        %p568 = pneg %p186
        %p569 = pneg %p183
        %p570 = scmp.lt.s32.totalorder %s33, 5
        %s571 = scalar_select %p570, %s33, 5
        %s572 = scalar_lea.vmem %s6, %s571
        %p573 = pneg %p212
        %p574 = pneg %p209
        %p575 = scmp.lt.s32.totalorder %s33, 5
        %s576 = scalar_select %p575, %s33, 5
        %s577 = scalar_lea.vmem %s7, %s576
        %p578 = pneg %p238
        %p579 = pneg %p235
        %p580 = scmp.lt.s32.totalorder %s33, 5
        %s581 = scalar_select %p580, %s33, 5
        %s582 = smul.addr %s581, 5
        %s583 = smul.addr %s582, 8
        %s584 = scalar_lea.vmem %s8, %s583
        %p585 = pneg %p264
        %p586 = pneg %p261
        %p587 = scmp.lt.s32.totalorder %s33, 5
        %s588 = scalar_select %p587, %s33, 5
        %s589 = scalar_lea.vmem %s9, %s588
        %p590 = pneg %p290
        %p591 = pneg %p287
        %p592 = scmp.lt.s32.totalorder %s33, 5
        %s593 = scalar_select %p592, %s33, 5
        %s594 = smul.addr %s593, 16
        %s595 = smul.addr %s594, 8
        %s596 = scalar_lea.vmem %s10, %s595
        %p597 = pneg %p316
        %p598 = pneg %p313
        %p599 = scmp.lt.s32.totalorder %s33, 5
        %s600 = scalar_select %p599, %s33, 5
        %s601 = scalar_lea.vmem %s11, %s600
        %p602 = pneg %p342
        %p603 = pneg %p339
        %p604 = scmp.lt.s32.totalorder %s33, 5
        %s605 = scalar_select %p604, %s33, 5
        %s606 = scalar_lea.vmem %s12, %s605
        %p607 = pneg %p368
        %p608 = pneg %p365
        %p609 = scmp.lt.s32.totalorder %s33, 5
        %s610 = scalar_select %p609, %s33, 5
        %s611 = scalar_lea.vmem %s13, %s610
        %p612 = pneg %p394
        %p613 = pneg %p391
        %p614 = pneg %p420
        %p615 = pneg %p417
        %s616 = sand.u32 %s407, 1
        %s617 = scalar_lea.sflag [#allocation4], %s616
        %s618 = sand.u32 %s407, 1
        %s619 = smul.addr %s618, 16
        %s620 = scalar_lea.vmem [#allocation3], %s619
        %p621 = scmp.lt.s32.totalorder %s32, 1
        %s622 = scalar_select %p621, %s32, 1
        %s623 = smul.addr %s622, 2
        %s624 = smul.addr %s623, 8
        %s625 = scalar_lea.vmem %s1, %s624
        %p626 = scmp.lt.s32.totalorder %s33, 5
        %s627 = scalar_select %p626, %s33, 5
        %s628 = smul.addr %s627, 5
        %s629 = smul.addr %s628, 8
        %s630 = scalar_lea.vmem %s2, %s629
        %p631 = scmp.lt.s32.totalorder %s33, 5
        %s632 = scalar_select %p631, %s33, 5
        %s633 = scalar_lea.vmem %s3, %s632
        %p634 = scmp.lt.s32.totalorder %s33, 5
        %s635 = scalar_select %p634, %s33, 5
        %s636 = smul.addr %s635, 5
        %s637 = smul.addr %s636, 8
        %s638 = scalar_lea.vmem %s4, %s637
        %p639 = scmp.lt.s32.totalorder %s33, 5
        %s640 = scalar_select %p639, %s33, 5
        %s641 = scalar_lea.vmem %s5, %s640
        %p642 = scmp.lt.s32.totalorder %s33, 5
        %s643 = scalar_select %p642, %s33, 5
        %s644 = scalar_lea.vmem %s6, %s643
        %p645 = scmp.lt.s32.totalorder %s33, 5
        %s646 = scalar_select %p645, %s33, 5
        %s647 = scalar_lea.vmem %s7, %s646
        %p648 = scmp.lt.s32.totalorder %s33, 5
        %s649 = scalar_select %p648, %s33, 5
        %s650 = smul.addr %s649, 5
        %s651 = smul.addr %s650, 8
        %s652 = scalar_lea.vmem %s8, %s651
        %p653 = scmp.lt.s32.totalorder %s33, 5
        %s654 = scalar_select %p653, %s33, 5
        %s655 = scalar_lea.vmem %s9, %s654
        %p656 = scmp.lt.s32.totalorder %s33, 5
        %s657 = scalar_select %p656, %s33, 5
        %s658 = smul.addr %s657, 16
        %s659 = smul.addr %s658, 8
        %s660 = scalar_lea.vmem %s10, %s659
        %p661 = scmp.lt.s32.totalorder %s33, 5
        %s662 = scalar_select %p661, %s33, 5
        %s663 = scalar_lea.vmem %s11, %s662
        %p664 = scmp.lt.s32.totalorder %s33, 5
        %s665 = scalar_select %p664, %s33, 5
        %s666 = scalar_lea.vmem %s12, %s665
        %p667 = scmp.lt.s32.totalorder %s33, 5
        %s668 = scalar_select %p667, %s33, 5
        %s669 = scalar_lea.vmem %s13, %s668
        %p670 = scmp.eq.s32.totalorder %s33, 0
        // Predicated region
        $region77: #{tpu_custom_call.1} parent=75 // pred_check
          %p671 = pneg %p670
        $region78: #{tpu_custom_call.1} parent=75 // pred_check_branch
          %673 = sbr.rel (%p671) target = $region80
        $region79: #{tpu_custom_call.1} parent=75 // pred_region
          %v674 = vld [vmem:[%s625] sm:$0xff]
          %v675 = vld [vmem:[%s625 + $0x8] sm:$0xff]
          %vm676 = vcmask 326656
          %677 = vst.msk [vmem:[#allocation2] sm:$0xff] %vm676, %v674
          %678 = vst.msk [vmem:[#allocation2 + $0x8] sm:$0xff] %vm676, %v675
        $region80: #{tpu_custom_call.1} parent=75 // pred_fallthru
          _
        %v679 = vld [vmem:[#allocation2] sm:$0xff]
        %v680 = vld [vmem:[#allocation2 + $0x8] sm:$0xff]
        %v681 = vld [vmem:[%s0] sm:$0xff]
        %v682 = vld [vmem:[%s0 + $0x8] sm:$0xff]
        %v683 = vld [vmem:[%s0 + $0x10] sm:$0xff]
        %v684 = vld [vmem:[%s0 + $0x18] sm:$0xff]
        %v685 = vld [vmem:[%s0 + $0x20] sm:$0xff]
        %v686 = vld [vmem:[%s0 + $0x28] sm:$0xff]
        %v687 = vld [vmem:[%s0 + $0x30] sm:$0xff]
        %v688 = vld [vmem:[%s0 + $0x38] sm:$0xff]
        %v689 = vld [vmem:[%s0 + $0x40] sm:$0xff]
        %v690 = vld [vmem:[%s0 + $0x48] sm:$0xff]
        %v691 = vld [vmem:[%s0 + $0x50] sm:$0xff]
        %v692 = vld [vmem:[%s0 + $0x58] sm:$0xff]
        %v693 = vld [vmem:[%s0 + $0x60] sm:$0xff]
        %v694 = vld [vmem:[%s0 + $0x68] sm:$0xff]
        %v695 = vld [vmem:[%s0 + $0x70] sm:$0xff]
        %v696 = vld [vmem:[%s0 + $0x78] sm:$0xff]
        %v697 = vld [vmem:[%s0 + $0x80] sm:$0xff]
        %v698 = vld [vmem:[%s0 + $0x88] sm:$0xff]
        %v699 = vld [vmem:[%s0 + $0x90] sm:$0xff]
        %v700 = vld [vmem:[%s0 + $0x98] sm:$0xff]
        %v701 = vld [vmem:[%s630] sm:$0xff]
        %v702 = vld [vmem:[%s630 + $0x8] sm:$0xff]
        %v703 = vld [vmem:[%s630 + $0x10] sm:$0xff]
        %v704 = vld [vmem:[%s630 + $0x18] sm:$0xff]
        %v705 = vld [vmem:[%s630 + $0x20] sm:$0xff]
        %v706 = vld [vmem:[%s633] sm:$0x1]
        %v708 = vlaneseq
        %v709 = vshrl.u32 %v708, 7
        %v710 = vsub.s32 0, %v709
        %v711 = vrot.slane %v706, %v710
        %vm713 = vcmask 326656
        %v715 = vsel %vm713, %v679, 0
        %v718 = vsel %vm713, %v680, 0
        %720 = vmatprep.subr.mxu0 0.0
        %721 = vmatpush1.msra.mxu0 %v701
        %722 = vmatprep.subr.mxu0 0.0
        %723 = vmatpush1.msra.mxu0 %v702
        %724 = vmatprep.subr.mxu0 0.0
        %725 = vmatpush1.msra.mxu0 %v703
        %726 = vmatprep.subr.mxu0 0.0
        %727 = vmatpush1.msra.mxu0 %v704
        %728 = vmatprep.subr.mxu0 0.0
        %729 = vmatpush1.msra.mxu0 %v705
        %730 = vmatprep.subr.mxu0 0.0
        %731 = vmatpush1.msra.mxu0 0.0
        %732 = vmatprep.subr.mxu0 0.0
        %733 = vmatpush1.msra.mxu0 0.0
        %734 = vmatprep.subr.mxu0 0.0
        %735 = vmatpush1.msra.mxu0 0.0
        %736 = vmatprep.subr.mxu0 0.0
        %737 = vmatpush1.msra.mxu0 0.0
        %738 = vmatprep.subr.mxu0 0.0
        %739 = vmatpush1.msra.mxu0 0.0
        %740 = vmatprep.subr.mxu0 0.0
        %741 = vmatpush1.msra.mxu0 0.0
        %742 = vmatprep.subr.mxu0 0.0
        %743 = vmatpush1.msra.mxu0 0.0
        %744 = vmatprep.subr.mxu0 0.0
        %745 = vmatpush1.msra.mxu0 0.0
        %746 = vmatprep.subr.mxu0 0.0
        %747 = vmatpush1.msra.mxu0 0.0
        %748 = vmatprep.subr.mxu0 0.0
        %749 = vmatpush1.msra.mxu0 0.0
        %750 = vmatprep.subr.mxu0 0.0
        %751 = vmatpush1.msra.mxu0 0.0
        %752 = vmatprep.subr.mxu0 0.0
        %753 = vmatpush1.msra.mxu0 0.0
        %754 = vmatprep.subr.mxu0 0.0
        %755 = vmatpush1.msra.mxu0 0.0
        %756 = vmatprep.subr.mxu0 0.0
        %757 = vmatpush1.msra.mxu0 0.0
        %758 = vmatprep.subr.mxu0 0.0
        %759 = vmatpush1.msra.mxu0 0.0
        %760 = vmatprep.subr.mxu0 0.0
        %761 = vmatpush1.msra.mxu0 0.0
        %762 = vmatprep.subr.mxu0 0.0
        %763 = vmatpush1.msra.mxu0 0.0
        %764 = vmatprep.subr.mxu0 0.0
        %765 = vmatpush1.msra.mxu0 0.0
        %766 = vmatprep.subr.mxu0 0.0
        %767 = vmatpush1.msra.mxu0 0.0
        %768 = vmatprep.subr.mxu0 0.0
        %769 = vmatpush1.msra.mxu0 0.0
        %770 = vmatprep.subr.mxu0 0.0
        %771 = vmatpush1.msra.mxu0 0.0
        %772 = vmatprep.subr.mxu0 0.0
        %773 = vmatpush1.msra.mxu0 0.0
        %774 = vmatprep.subr.mxu0 0.0
        %775 = vmatpush1.msra.mxu0 0.0
        %776 = vmatprep.subr.mxu0 0.0
        %777 = vmatpush1.msra.mxu0 0.0
        %778 = vmatprep.subr.mxu0 0.0
        %779 = vmatpush1.msra.mxu0 0.0
        %780 = vmatprep.subr.mxu0 0.0
        %781 = vmatpush1.msra.mxu0 0.0
        %782 = vmatprep.subr.mxu0 0.0
        %783 = vmatpush1.msra.mxu0 0.0
        %784 = vmatprep.mubr.f32.mxu0 0.0
        %785 = vmatmul.mubr.f32.gmra.mrb[0].mxu0 %v715
        %v786 = vpop.f32.mrb[0].mxu0
        %v787 = vadd.f32 %v711, %v786
        %v788 = vpop.f32.mrb[0].mxu0
        %789 = vmatprep.mubr.f32.mxu0 0.0
        %790 = vmatmul.mubr.f32.gmra.mrb[0].mxu0 %v718
        %v791 = vpop.f32.mrb[0].mxu0
        %v792 = vadd.f32 %v711, %v791
        %v793 = vpop.f32.mrb[0].mxu0
        %794 = vdwg.mxu0
        %v795 = vmul.f32 %v787, 0.5
        %v796 = vmul.f32 %v792, 0.5
        %v797 = vmul.f32 %v795, %v681
        %v798 = vmul.f32 %v796, %v682
        %v799 = vmul.f32 %v795, %v683
        %v800 = vmul.f32 %v796, %v684
        %v801 = vmul.f32 %v795, %v685
        %v802 = vmul.f32 %v796, %v686
        %v803 = vmul.f32 %v795, %v687
        %v804 = vmul.f32 %v796, %v688
        %v805 = vmul.f32 %v795, %v689
        %v806 = vmul.f32 %v796, %v690
        %v807 = vmul.f32 %v795, %v691
        %v808 = vmul.f32 %v796, %v692
        %v809 = vmul.f32 %v795, %v693
        %v810 = vmul.f32 %v796, %v694
        %v811 = vmul.f32 %v795, %v695
        %v812 = vmul.f32 %v796, %v696
        %v813 = vmul.f32 %v795, %v697
        %v814 = vmul.f32 %v796, %v698
        %v815 = vmul.f32 %v795, %v699
        %v816 = vmul.f32 %v796, %v700
        %819 = vrot.lane.b32.xlu0 %v787, 88
        %v820 = vpop.permute.xlu0 %819
        %821 = vrot.lane.b32.xlu0 %v792, 88
        %v822 = vpop.permute.xlu0 %821
        %v824 = vsel %vm713, %v797, 0
        %v827 = vsel %vm713, %v798, 0
        %v830 = vsel %vm713, %v799, 0
        %v833 = vsel %vm713, %v800, 0
        %v836 = vsel %vm713, %v801, 0
        %v839 = vsel %vm713, %v802, 0
        %v842 = vsel %vm713, %v803, 0
        %v845 = vsel %vm713, %v804, 0
        %v848 = vsel %vm713, %v805, 0
        %v851 = vsel %vm713, %v806, 0
        %v854 = vsel %vm713, %v807, 0
        %v857 = vsel %vm713, %v808, 0
        %v860 = vsel %vm713, %v809, 0
        %v863 = vsel %vm713, %v810, 0
        %v866 = vsel %vm713, %v811, 0
        %v869 = vsel %vm713, %v812, 0
        %v872 = vsel %vm713, %v813, 0
        %v875 = vsel %vm713, %v814, 0
        %v878 = vsel %vm713, %v815, 0
        %v881 = vsel %vm713, %v816, 0
        %v883 = vsel %vm713, %v820, 0
        %v885 = vsel %vm713, %v822, 0
        %887 = vmatprep.subr.mxu0 0.0
        %888 = vmatpush1.xpose.msra.mxu0 %v883
        %889 = vmatprep.subr.mxu0 0.0
        %890 = vmatpush1.xpose.msra.mxu0 %v885
        %891 = vmatprep.subr.mxu0 0.0
        %892 = vmatpush1.xpose.msra.mxu0 0.0
        %893 = vmatprep.subr.mxu0 0.0
        %894 = vmatpush1.xpose.msra.mxu0 0.0
        %895 = vmatprep.subr.mxu0 0.0
        %896 = vmatpush1.xpose.msra.mxu0 0.0
        %897 = vmatprep.subr.mxu0 0.0
        %898 = vmatpush1.xpose.msra.mxu0 0.0
        %899 = vmatprep.subr.mxu0 0.0
        %900 = vmatpush1.xpose.msra.mxu0 0.0
        %901 = vmatprep.subr.mxu0 0.0
        %902 = vmatpush1.xpose.msra.mxu0 0.0
        %903 = vmatprep.subr.mxu0 0.0
        %904 = vmatpush1.xpose.msra.mxu0 0.0
        %905 = vmatprep.subr.mxu0 0.0
        %906 = vmatpush1.xpose.msra.mxu0 0.0
        %907 = vmatprep.subr.mxu0 0.0
        %908 = vmatpush1.xpose.msra.mxu0 0.0
        %909 = vmatprep.subr.mxu0 0.0
        %910 = vmatpush1.xpose.msra.mxu0 0.0
        %911 = vmatprep.subr.mxu0 0.0
        %912 = vmatpush1.xpose.msra.mxu0 0.0
        %913 = vmatprep.subr.mxu0 0.0
        %914 = vmatpush1.xpose.msra.mxu0 0.0
        %915 = vmatprep.subr.mxu0 0.0
        %916 = vmatpush1.xpose.msra.mxu0 0.0
        %917 = vmatprep.subr.mxu0 0.0
        %918 = vmatpush1.xpose.msra.mxu0 0.0
        %919 = vmatprep.subr.mxu0 0.0
        %920 = vmatpush1.xpose.msra.mxu0 0.0
        %921 = vmatprep.subr.mxu0 0.0
        %922 = vmatpush1.xpose.msra.mxu0 0.0
        %923 = vmatprep.subr.mxu0 0.0
        %924 = vmatpush1.xpose.msra.mxu0 0.0
        %925 = vmatprep.subr.mxu0 0.0
        %926 = vmatpush1.xpose.msra.mxu0 0.0
        %927 = vmatprep.subr.mxu0 0.0
        %928 = vmatpush1.xpose.msra.mxu0 0.0
        %929 = vmatprep.subr.mxu0 0.0
        %930 = vmatpush1.xpose.msra.mxu0 0.0
        %931 = vmatprep.subr.mxu0 0.0
        %932 = vmatpush1.xpose.msra.mxu0 0.0
        %933 = vmatprep.subr.mxu0 0.0
        %934 = vmatpush1.xpose.msra.mxu0 0.0
        %935 = vmatprep.subr.mxu0 0.0
        %936 = vmatpush1.xpose.msra.mxu0 0.0
        %937 = vmatprep.subr.mxu0 0.0
        %938 = vmatpush1.xpose.msra.mxu0 0.0
        %939 = vmatprep.subr.mxu0 0.0
        %940 = vmatpush1.xpose.msra.mxu0 0.0
        %941 = vmatprep.subr.mxu0 0.0
        %942 = vmatpush1.xpose.msra.mxu0 0.0
        %943 = vmatprep.subr.mxu0 0.0
        %944 = vmatpush1.xpose.msra.mxu0 0.0
        %945 = vmatprep.subr.mxu0 0.0
        %946 = vmatpush1.xpose.msra.mxu0 0.0
        %947 = vmatprep.subr.mxu0 0.0
        %948 = vmatpush1.xpose.msra.mxu0 0.0
        %949 = vmatprep.subr.mxu0 0.0
        %950 = vmatpush1.xpose.msra.mxu0 0.0
        %951 = vmatprep.mubr.f32.mxu0 0.0
        %952 = vmatmul.mubr.f32.gmra.mrb[0].mxu0 %v824
        %v953 = vpop.f32.mrb[0].mxu0
        %v954 = vadd.f32 0.0, %v953
        %v955 = vpop.f32.mrb[0].mxu0
        %956 = vmatprep.mubr.f32.mxu0 0.0
        %957 = vmatmul.mubr.f32.gmra.mrb[0].mxu0 %v827
        %v958 = vpop.f32.mrb[0].mxu0
        %v959 = vadd.f32 0.0, %v958
        %v960 = vpop.f32.mrb[0].mxu0
        %961 = vmatprep.mubr.f32.mxu0 0.0
        %962 = vmatmul.mubr.f32.gmra.mrb[0].mxu0 %v830
        %v963 = vpop.f32.mrb[0].mxu0
        %v964 = vadd.f32 0.0, %v963
        %v965 = vpop.f32.mrb[0].mxu0
        %966 = vmatprep.mubr.f32.mxu0 0.0
        %967 = vmatmul.mubr.f32.gmra.mrb[0].mxu0 %v833
        %v968 = vpop.f32.mrb[0].mxu0
        %v969 = vadd.f32 0.0, %v968
        %v970 = vpop.f32.mrb[0].mxu0
        %971 = vmatprep.mubr.f32.mxu0 0.0
        %972 = vmatmul.mubr.f32.gmra.mrb[0].mxu0 %v836
        %v973 = vpop.f32.mrb[0].mxu0
        %v974 = vadd.f32 0.0, %v973
        %v975 = vpop.f32.mrb[0].mxu0
        %976 = vmatprep.mubr.f32.mxu0 0.0
        %977 = vmatmul.mubr.f32.gmra.mrb[0].mxu0 %v839
        %v978 = vpop.f32.mrb[0].mxu0
        %v979 = vadd.f32 0.0, %v978
        %v980 = vpop.f32.mrb[0].mxu0
        %981 = vmatprep.mubr.f32.mxu0 0.0
        %982 = vmatmul.mubr.f32.gmra.mrb[0].mxu0 %v842
        %v983 = vpop.f32.mrb[0].mxu0
        %v984 = vadd.f32 0.0, %v983
        %v985 = vpop.f32.mrb[0].mxu0
        %986 = vmatprep.mubr.f32.mxu0 0.0
        %987 = vmatmul.mubr.f32.gmra.mrb[0].mxu0 %v845
        %v988 = vpop.f32.mrb[0].mxu0
        %v989 = vadd.f32 0.0, %v988
        %v990 = vpop.f32.mrb[0].mxu0
        %991 = vmatprep.mubr.f32.mxu0 0.0
        %992 = vmatmul.mubr.f32.gmra.mrb[0].mxu0 %v848
        %v993 = vpop.f32.mrb[0].mxu0
        %v994 = vadd.f32 0.0, %v993
        %v995 = vpop.f32.mrb[0].mxu0
        %996 = vmatprep.mubr.f32.mxu0 0.0
        %997 = vmatmul.mubr.f32.gmra.mrb[0].mxu0 %v851
        %v998 = vpop.f32.mrb[0].mxu0
        %v999 = vadd.f32 0.0, %v998
        %v1000 = vpop.f32.mrb[0].mxu0
        %1001 = vmatprep.mubr.f32.mxu0 0.0
        %1002 = vmatmul.mubr.f32.gmra.mrb[0].mxu0 %v854
        %v1003 = vpop.f32.mrb[0].mxu0
        %v1004 = vadd.f32 0.0, %v1003
        %v1005 = vpop.f32.mrb[0].mxu0
        %1006 = vmatprep.mubr.f32.mxu0 0.0
        %1007 = vmatmul.mubr.f32.gmra.mrb[0].mxu0 %v857
        %v1008 = vpop.f32.mrb[0].mxu0
        %v1009 = vadd.f32 0.0, %v1008
        %v1010 = vpop.f32.mrb[0].mxu0
        %1011 = vmatprep.mubr.f32.mxu0 0.0
        %1012 = vmatmul.mubr.f32.gmra.mrb[0].mxu0 %v860
        %v1013 = vpop.f32.mrb[0].mxu0
        %v1014 = vadd.f32 0.0, %v1013
        %v1015 = vpop.f32.mrb[0].mxu0
        %1016 = vmatprep.mubr.f32.mxu0 0.0
        %1017 = vmatmul.mubr.f32.gmra.mrb[0].mxu0 %v863
        %v1018 = vpop.f32.mrb[0].mxu0
        %v1019 = vadd.f32 0.0, %v1018
        %v1020 = vpop.f32.mrb[0].mxu0
        %1021 = vmatprep.mubr.f32.mxu0 0.0
        %1022 = vmatmul.mubr.f32.gmra.mrb[0].mxu0 %v866
        %v1023 = vpop.f32.mrb[0].mxu0
        %v1024 = vadd.f32 0.0, %v1023
        %v1025 = vpop.f32.mrb[0].mxu0
        %1026 = vmatprep.mubr.f32.mxu0 0.0
        %1027 = vmatmul.mubr.f32.gmra.mrb[0].mxu0 %v869
        %v1028 = vpop.f32.mrb[0].mxu0
        %v1029 = vadd.f32 0.0, %v1028
        %v1030 = vpop.f32.mrb[0].mxu0
        %1031 = vmatprep.mubr.f32.mxu0 0.0
        %1032 = vmatmul.mubr.f32.gmra.mrb[0].mxu0 %v872
        %v1033 = vpop.f32.mrb[0].mxu0
        %v1034 = vadd.f32 0.0, %v1033
        %v1035 = vpop.f32.mrb[0].mxu0
        %1036 = vmatprep.mubr.f32.mxu0 0.0
        %1037 = vmatmul.mubr.f32.gmra.mrb[0].mxu0 %v875
        %v1038 = vpop.f32.mrb[0].mxu0
        %v1039 = vadd.f32 0.0, %v1038
        %v1040 = vpop.f32.mrb[0].mxu0
        %1041 = vmatprep.mubr.f32.mxu0 0.0
        %1042 = vmatmul.mubr.f32.gmra.mrb[0].mxu0 %v878
        %v1043 = vpop.f32.mrb[0].mxu0
        %v1044 = vadd.f32 0.0, %v1043
        %v1045 = vpop.f32.mrb[0].mxu0
        %1046 = vmatprep.mubr.f32.mxu0 0.0
        %1047 = vmatmul.mubr.f32.gmra.mrb[0].mxu0 %v881
        %v1048 = vpop.f32.mrb[0].mxu0
        %v1049 = vadd.f32 0.0, %v1048
        %v1050 = vpop.f32.mrb[0].mxu0
        %1051 = vdwg.mxu0
        %vm1052 = vcmask 130048
        %v1053 = vsel %vm1052, %v954, -inf
        %1054 = vmax.xlane.f32.xlu0 %v1053
        %v1055 = vpop.xlane.xlu0 %1054
        %v1056 = vsel %vm1052, %v959, -inf
        %1057 = vmax.xlane.f32.xlu0 %v1056
        %v1058 = vpop.xlane.xlu0 %1057
        %v1059 = vsel %vm1052, %v964, -inf
        %1060 = vmax.xlane.f32.xlu0 %v1059
        %v1061 = vpop.xlane.xlu0 %1060
        %v1062 = vsel %vm1052, %v969, -inf
        %1063 = vmax.xlane.f32.xlu0 %v1062
        %v1064 = vpop.xlane.xlu0 %1063
        %v1065 = vsel %vm1052, %v974, -inf
        %1066 = vmax.xlane.f32.xlu0 %v1065
        %v1067 = vpop.xlane.xlu0 %1066
        %v1068 = vsel %vm1052, %v979, -inf
        %1069 = vmax.xlane.f32.xlu0 %v1068
        %v1070 = vpop.xlane.xlu0 %1069
        %v1071 = vsel %vm1052, %v984, -inf
        %1072 = vmax.xlane.f32.xlu0 %v1071
        %v1073 = vpop.xlane.xlu0 %1072
        %v1074 = vsel %vm1052, %v989, -inf
        %1075 = vmax.xlane.f32.xlu0 %v1074
        %v1076 = vpop.xlane.xlu0 %1075
        %v1077 = vsel %vm1052, %v994, -inf
        %1078 = vmax.xlane.f32.xlu0 %v1077
        %v1079 = vpop.xlane.xlu0 %1078
        %v1080 = vsel %vm1052, %v999, -inf
        %1081 = vmax.xlane.f32.xlu0 %v1080
        %v1082 = vpop.xlane.xlu0 %1081
        %v1083 = vsel %vm1052, %v1004, -inf
        %1084 = vmax.xlane.f32.xlu0 %v1083
        %v1085 = vpop.xlane.xlu0 %1084
        %v1086 = vsel %vm1052, %v1009, -inf
        %1087 = vmax.xlane.f32.xlu0 %v1086
        %v1088 = vpop.xlane.xlu0 %1087
        %v1089 = vsel %vm1052, %v1014, -inf
        %1090 = vmax.xlane.f32.xlu0 %v1089
        %v1091 = vpop.xlane.xlu0 %1090
        %v1092 = vsel %vm1052, %v1019, -inf
        %1093 = vmax.xlane.f32.xlu0 %v1092
        %v1094 = vpop.xlane.xlu0 %1093
        %v1095 = vsel %vm1052, %v1024, -inf
        %1096 = vmax.xlane.f32.xlu0 %v1095
        %v1097 = vpop.xlane.xlu0 %1096
        %v1098 = vsel %vm1052, %v1029, -inf
        %1099 = vmax.xlane.f32.xlu0 %v1098
        %v1100 = vpop.xlane.xlu0 %1099
        %v1101 = vsel %vm1052, %v1034, -inf
        %1102 = vmax.xlane.f32.xlu0 %v1101
        %v1103 = vpop.xlane.xlu0 %1102
        %v1104 = vsel %vm1052, %v1039, -inf
        %1105 = vmax.xlane.f32.xlu0 %v1104
        %v1106 = vpop.xlane.xlu0 %1105
        %v1107 = vsel %vm1052, %v1044, -inf
        %1108 = vmax.xlane.f32.xlu0 %v1107
        %v1109 = vpop.xlane.xlu0 %1108
        %v1110 = vsel %vm1052, %v1049, -inf
        %1111 = vmax.xlane.f32.xlu0 %v1110
        %v1112 = vpop.xlane.xlu0 %1111
        %v1113 = vsub.f32 %v954, %v1055
        %v1114 = vsub.f32 %v959, %v1058
        %v1115 = vsub.f32 %v964, %v1061
        %v1116 = vsub.f32 %v969, %v1064
        %v1117 = vsub.f32 %v974, %v1067
        %v1118 = vsub.f32 %v979, %v1070
        %v1119 = vsub.f32 %v984, %v1073
        %v1120 = vsub.f32 %v989, %v1076
        %v1121 = vsub.f32 %v994, %v1079
        %v1122 = vsub.f32 %v999, %v1082
        %v1123 = vsub.f32 %v1004, %v1085
        %v1124 = vsub.f32 %v1009, %v1088
        %v1125 = vsub.f32 %v1014, %v1091
        %v1126 = vsub.f32 %v1019, %v1094
        %v1127 = vsub.f32 %v1024, %v1097
        %v1128 = vsub.f32 %v1029, %v1100
        %v1129 = vsub.f32 %v1034, %v1103
        %v1130 = vsub.f32 %v1039, %v1106
        %v1131 = vsub.f32 %v1044, %v1109
        %v1132 = vsub.f32 %v1049, %v1112
        %v1133 = vmul.f32 %v1113, 1.442695
        %v1134 = vpow.pop %v1133
        %v1135 = vmul.f32 %v1114, 1.442695
        %v1136 = vpow.pop %v1135
        %v1137 = vmul.f32 %v1115, 1.442695
        %v1138 = vpow.pop %v1137
        %v1139 = vmul.f32 %v1116, 1.442695
        %v1140 = vpow.pop %v1139
        %v1141 = vmul.f32 %v1117, 1.442695
        %v1142 = vpow.pop %v1141
        %v1143 = vmul.f32 %v1118, 1.442695
        %v1144 = vpow.pop %v1143
        %v1145 = vmul.f32 %v1119, 1.442695
        %v1146 = vpow.pop %v1145
        %v1147 = vmul.f32 %v1120, 1.442695
        %v1148 = vpow.pop %v1147
        %v1149 = vmul.f32 %v1121, 1.442695
        %v1150 = vpow.pop %v1149
        %v1151 = vmul.f32 %v1122, 1.442695
        %v1152 = vpow.pop %v1151
        %v1153 = vmul.f32 %v1123, 1.442695
        %v1154 = vpow.pop %v1153
        %v1155 = vmul.f32 %v1124, 1.442695
        %v1156 = vpow.pop %v1155
        %v1157 = vmul.f32 %v1125, 1.442695
        %v1158 = vpow.pop %v1157
        %v1159 = vmul.f32 %v1126, 1.442695
        %v1160 = vpow.pop %v1159
        %v1161 = vmul.f32 %v1127, 1.442695
        %v1162 = vpow.pop %v1161
        %v1163 = vmul.f32 %v1128, 1.442695
        %v1164 = vpow.pop %v1163
        %v1165 = vmul.f32 %v1129, 1.442695
        %v1166 = vpow.pop %v1165
        %v1167 = vmul.f32 %v1130, 1.442695
        %v1168 = vpow.pop %v1167
        %v1169 = vmul.f32 %v1131, 1.442695
        %v1170 = vpow.pop %v1169
        %v1171 = vmul.f32 %v1132, 1.442695
        %v1172 = vpow.pop %v1171
        %v1173 = vsel %vm1052, %v1134, 0.0
        %1174 = vadd.xlane.f32.xlu0 %v1173
        %v1175 = vpop.xlane.xlu0 %1174
        %v1176 = vsel %vm1052, %v1136, 0.0
        %1177 = vadd.xlane.f32.xlu0 %v1176
        %v1178 = vpop.xlane.xlu0 %1177
        %v1179 = vsel %vm1052, %v1138, 0.0
        %1180 = vadd.xlane.f32.xlu0 %v1179
        %v1181 = vpop.xlane.xlu0 %1180
        %v1182 = vsel %vm1052, %v1140, 0.0
        %1183 = vadd.xlane.f32.xlu0 %v1182
        %v1184 = vpop.xlane.xlu0 %1183
        %v1185 = vsel %vm1052, %v1142, 0.0
        %1186 = vadd.xlane.f32.xlu0 %v1185
        %v1187 = vpop.xlane.xlu0 %1186
        %v1188 = vsel %vm1052, %v1144, 0.0
        %1189 = vadd.xlane.f32.xlu0 %v1188
        %v1190 = vpop.xlane.xlu0 %1189
        %v1191 = vsel %vm1052, %v1146, 0.0
        %1192 = vadd.xlane.f32.xlu0 %v1191
        %v1193 = vpop.xlane.xlu0 %1192
        %v1194 = vsel %vm1052, %v1148, 0.0
        %1195 = vadd.xlane.f32.xlu0 %v1194
        %v1196 = vpop.xlane.xlu0 %1195
        %v1197 = vsel %vm1052, %v1150, 0.0
        %1198 = vadd.xlane.f32.xlu0 %v1197
        %v1199 = vpop.xlane.xlu0 %1198
        %v1200 = vsel %vm1052, %v1152, 0.0
        %1201 = vadd.xlane.f32.xlu0 %v1200
        %v1202 = vpop.xlane.xlu0 %1201
        %v1203 = vsel %vm1052, %v1154, 0.0
        %1204 = vadd.xlane.f32.xlu0 %v1203
        %v1205 = vpop.xlane.xlu0 %1204
        %v1206 = vsel %vm1052, %v1156, 0.0
        %1207 = vadd.xlane.f32.xlu0 %v1206
        %v1208 = vpop.xlane.xlu0 %1207
        %v1209 = vsel %vm1052, %v1158, 0.0
        %1210 = vadd.xlane.f32.xlu0 %v1209
        %v1211 = vpop.xlane.xlu0 %1210
        %v1212 = vsel %vm1052, %v1160, 0.0
        %1213 = vadd.xlane.f32.xlu0 %v1212
        %v1214 = vpop.xlane.xlu0 %1213
        %v1215 = vsel %vm1052, %v1162, 0.0
        %1216 = vadd.xlane.f32.xlu0 %v1215
        %v1217 = vpop.xlane.xlu0 %1216
        %v1218 = vsel %vm1052, %v1164, 0.0
        %1219 = vadd.xlane.f32.xlu0 %v1218
        %v1220 = vpop.xlane.xlu0 %1219
        %v1221 = vsel %vm1052, %v1166, 0.0
        %1222 = vadd.xlane.f32.xlu0 %v1221
        %v1223 = vpop.xlane.xlu0 %1222
        %v1224 = vsel %vm1052, %v1168, 0.0
        %1225 = vadd.xlane.f32.xlu0 %v1224
        %v1226 = vpop.xlane.xlu0 %1225
        %v1227 = vsel %vm1052, %v1170, 0.0
        %1228 = vadd.xlane.f32.xlu0 %v1227
        %v1229 = vpop.xlane.xlu0 %1228
        %v1230 = vsel %vm1052, %v1172, 0.0
        %1231 = vadd.xlane.f32.xlu0 %v1230
        %v1232 = vpop.xlane.xlu0 %1231
        %v1233 = vrcp.pop %v1175
        %v1234 = vmul.f32 %v1134, %v1233
        %v1235 = vrcp.pop %v1178
        %v1236 = vmul.f32 %v1136, %v1235
        %v1237 = vrcp.pop %v1181
        %v1238 = vmul.f32 %v1138, %v1237
        %v1239 = vrcp.pop %v1184
        %v1240 = vmul.f32 %v1140, %v1239
        %v1241 = vrcp.pop %v1187
        %v1242 = vmul.f32 %v1142, %v1241
        %v1243 = vrcp.pop %v1190
        %v1244 = vmul.f32 %v1144, %v1243
        %v1245 = vrcp.pop %v1193
        %v1246 = vmul.f32 %v1146, %v1245
        %v1247 = vrcp.pop %v1196
        %v1248 = vmul.f32 %v1148, %v1247
        %v1249 = vrcp.pop %v1199
        %v1250 = vmul.f32 %v1150, %v1249
        %v1251 = vrcp.pop %v1202
        %v1252 = vmul.f32 %v1152, %v1251
        %v1253 = vrcp.pop %v1205
        %v1254 = vmul.f32 %v1154, %v1253
        %v1255 = vrcp.pop %v1208
        %v1256 = vmul.f32 %v1156, %v1255
        %v1257 = vrcp.pop %v1211
        %v1258 = vmul.f32 %v1158, %v1257
        %v1259 = vrcp.pop %v1214
        %v1260 = vmul.f32 %v1160, %v1259
        %v1261 = vrcp.pop %v1217
        %v1262 = vmul.f32 %v1162, %v1261
        %v1263 = vrcp.pop %v1220
        %v1264 = vmul.f32 %v1164, %v1263
        %v1265 = vrcp.pop %v1223
        %v1266 = vmul.f32 %v1166, %v1265
        %v1267 = vrcp.pop %v1226
        %v1268 = vmul.f32 %v1168, %v1267
        %v1269 = vrcp.pop %v1229
        %v1270 = vmul.f32 %v1170, %v1269
        %v1271 = vrcp.pop %v1232
        %v1272 = vmul.f32 %v1172, %v1271
        %1273 = vrot.lane.b32.xlu0 %v787, 48
        %v1274 = vpop.permute.xlu0 %1273
        %1275 = vrot.lane.b32.xlu0 %v792, 48
        %v1276 = vpop.permute.xlu0 %1275
        %v1280 = vsel %vm1052, %v1234, 0
        %v1283 = vsel %vm1052, %v1236, 0
        %v1286 = vsel %vm1052, %v1238, 0
        %v1289 = vsel %vm1052, %v1240, 0
        %v1292 = vsel %vm1052, %v1242, 0
        %v1295 = vsel %vm1052, %v1244, 0
        %v1298 = vsel %vm1052, %v1246, 0
        %v1301 = vsel %vm1052, %v1248, 0
        %v1304 = vsel %vm1052, %v1250, 0
        %v1307 = vsel %vm1052, %v1252, 0
        %v1310 = vsel %vm1052, %v1254, 0
        %v1313 = vsel %vm1052, %v1256, 0
        %v1316 = vsel %vm1052, %v1258, 0
        %v1319 = vsel %vm1052, %v1260, 0
        %v1322 = vsel %vm1052, %v1262, 0
        %v1325 = vsel %vm1052, %v1264, 0
        %v1328 = vsel %vm1052, %v1266, 0
        %v1331 = vsel %vm1052, %v1268, 0
        %v1334 = vsel %vm1052, %v1270, 0
        %v1337 = vsel %vm1052, %v1272, 0
        %1339 = vmatprep.subr.mxu0 0.0
        %1340 = vmatpush1.msra.mxu0 %v1274
        %1341 = vmatprep.subr.mxu0 0.0
        %1342 = vmatpush1.msra.mxu0 %v1276
        %1343 = vmatprep.subr.mxu0 0.0
        %1344 = vmatpush1.msra.mxu0 0.0
        %1345 = vmatprep.subr.mxu0 0.0
        %1346 = vmatpush1.msra.mxu0 0.0
        %1347 = vmatprep.subr.mxu0 0.0
        %1348 = vmatpush1.msra.mxu0 0.0
        %1349 = vmatprep.subr.mxu0 0.0
        %1350 = vmatpush1.msra.mxu0 0.0
        %1351 = vmatprep.subr.mxu0 0.0
        %1352 = vmatpush1.msra.mxu0 0.0
        %1353 = vmatprep.subr.mxu0 0.0
        %1354 = vmatpush1.msra.mxu0 0.0
        %1355 = vmatprep.subr.mxu0 0.0
        %1356 = vmatpush1.msra.mxu0 0.0
        %1357 = vmatprep.subr.mxu0 0.0
        %1358 = vmatpush1.msra.mxu0 0.0
        %1359 = vmatprep.subr.mxu0 0.0
        %1360 = vmatpush1.msra.mxu0 0.0
        %1361 = vmatprep.subr.mxu0 0.0
        %1362 = vmatpush1.msra.mxu0 0.0
        %1363 = vmatprep.subr.mxu0 0.0
        %1364 = vmatpush1.msra.mxu0 0.0
        %1365 = vmatprep.subr.mxu0 0.0
        %1366 = vmatpush1.msra.mxu0 0.0
        %1367 = vmatprep.subr.mxu0 0.0
        %1368 = vmatpush1.msra.mxu0 0.0
        %1369 = vmatprep.subr.mxu0 0.0
        %1370 = vmatpush1.msra.mxu0 0.0
        %1371 = vmatprep.subr.mxu0 0.0
        %1372 = vmatpush1.msra.mxu0 0.0
        %1373 = vmatprep.subr.mxu0 0.0
        %1374 = vmatpush1.msra.mxu0 0.0
        %1375 = vmatprep.subr.mxu0 0.0
        %1376 = vmatpush1.msra.mxu0 0.0
        %1377 = vmatprep.subr.mxu0 0.0
        %1378 = vmatpush1.msra.mxu0 0.0
        %1379 = vmatprep.subr.mxu0 0.0
        %1380 = vmatpush1.msra.mxu0 0.0
        %1381 = vmatprep.subr.mxu0 0.0
        %1382 = vmatpush1.msra.mxu0 0.0
        %1383 = vmatprep.subr.mxu0 0.0
        %1384 = vmatpush1.msra.mxu0 0.0
        %1385 = vmatprep.subr.mxu0 0.0
        %1386 = vmatpush1.msra.mxu0 0.0
        %1387 = vmatprep.subr.mxu0 0.0
        %1388 = vmatpush1.msra.mxu0 0.0
        %1389 = vmatprep.subr.mxu0 0.0
        %1390 = vmatpush1.msra.mxu0 0.0
        %1391 = vmatprep.subr.mxu0 0.0
        %1392 = vmatpush1.msra.mxu0 0.0
        %1393 = vmatprep.subr.mxu0 0.0
        %1394 = vmatpush1.msra.mxu0 0.0
        %1395 = vmatprep.subr.mxu0 0.0
        %1396 = vmatpush1.msra.mxu0 0.0
        %1397 = vmatprep.subr.mxu0 0.0
        %1398 = vmatpush1.msra.mxu0 0.0
        %1399 = vmatprep.subr.mxu0 0.0
        %1400 = vmatpush1.msra.mxu0 0.0
        %1401 = vmatprep.subr.mxu0 0.0
        %1402 = vmatpush1.msra.mxu0 0.0
        %1403 = vmatprep.mubr.f32.mxu0 0.0
        %1404 = vmatmul.mubr.f32.gmra.mrb[0].mxu0 %v1280
        %v1405 = vpop.f32.mrb[0].mxu0
        %v1406 = vadd.f32 0.0, %v1405
        %v1407 = vpop.f32.mrb[0].mxu0
        %1408 = vmatprep.mubr.f32.mxu0 0.0
        %1409 = vmatmul.mubr.f32.gmra.mrb[0].mxu0 %v1283
        %v1410 = vpop.f32.mrb[0].mxu0
        %v1411 = vadd.f32 0.0, %v1410
        %v1412 = vpop.f32.mrb[0].mxu0
        %1413 = vmatprep.mubr.f32.mxu0 0.0
        %1414 = vmatmul.mubr.f32.gmra.mrb[0].mxu0 %v1286
        %v1415 = vpop.f32.mrb[0].mxu0
        %v1416 = vadd.f32 0.0, %v1415
        %v1417 = vpop.f32.mrb[0].mxu0
        %1418 = vmatprep.mubr.f32.mxu0 0.0
        %1419 = vmatmul.mubr.f32.gmra.mrb[0].mxu0 %v1289
        %v1420 = vpop.f32.mrb[0].mxu0
        %v1421 = vadd.f32 0.0, %v1420
        %v1422 = vpop.f32.mrb[0].mxu0
        %1423 = vmatprep.mubr.f32.mxu0 0.0
        %1424 = vmatmul.mubr.f32.gmra.mrb[0].mxu0 %v1292
        %v1425 = vpop.f32.mrb[0].mxu0
        %v1426 = vadd.f32 0.0, %v1425
        %v1427 = vpop.f32.mrb[0].mxu0
        %1428 = vmatprep.mubr.f32.mxu0 0.0
        %1429 = vmatmul.mubr.f32.gmra.mrb[0].mxu0 %v1295
        %v1430 = vpop.f32.mrb[0].mxu0
        %v1431 = vadd.f32 0.0, %v1430
        %v1432 = vpop.f32.mrb[0].mxu0
        %1433 = vmatprep.mubr.f32.mxu0 0.0
        %1434 = vmatmul.mubr.f32.gmra.mrb[0].mxu0 %v1298
        %v1435 = vpop.f32.mrb[0].mxu0
        %v1436 = vadd.f32 0.0, %v1435
        %v1437 = vpop.f32.mrb[0].mxu0
        %1438 = vmatprep.mubr.f32.mxu0 0.0
        %1439 = vmatmul.mubr.f32.gmra.mrb[0].mxu0 %v1301
        %v1440 = vpop.f32.mrb[0].mxu0
        %v1441 = vadd.f32 0.0, %v1440
        %v1442 = vpop.f32.mrb[0].mxu0
        %1443 = vmatprep.mubr.f32.mxu0 0.0
        %1444 = vmatmul.mubr.f32.gmra.mrb[0].mxu0 %v1304
        %v1445 = vpop.f32.mrb[0].mxu0
        %v1446 = vadd.f32 0.0, %v1445
        %v1447 = vpop.f32.mrb[0].mxu0
        %1448 = vmatprep.mubr.f32.mxu0 0.0
        %1449 = vmatmul.mubr.f32.gmra.mrb[0].mxu0 %v1307
        %v1450 = vpop.f32.mrb[0].mxu0
        %v1451 = vadd.f32 0.0, %v1450
        %v1452 = vpop.f32.mrb[0].mxu0
        %1453 = vmatprep.mubr.f32.mxu0 0.0
        %1454 = vmatmul.mubr.f32.gmra.mrb[0].mxu0 %v1310
        %v1455 = vpop.f32.mrb[0].mxu0
        %v1456 = vadd.f32 0.0, %v1455
        %v1457 = vpop.f32.mrb[0].mxu0
        %1458 = vmatprep.mubr.f32.mxu0 0.0
        %1459 = vmatmul.mubr.f32.gmra.mrb[0].mxu0 %v1313
        %v1460 = vpop.f32.mrb[0].mxu0
        %v1461 = vadd.f32 0.0, %v1460
        %v1462 = vpop.f32.mrb[0].mxu0
        %1463 = vmatprep.mubr.f32.mxu0 0.0
        %1464 = vmatmul.mubr.f32.gmra.mrb[0].mxu0 %v1316
        %v1465 = vpop.f32.mrb[0].mxu0
        %v1466 = vadd.f32 0.0, %v1465
        %v1467 = vpop.f32.mrb[0].mxu0
        %1468 = vmatprep.mubr.f32.mxu0 0.0
        %1469 = vmatmul.mubr.f32.gmra.mrb[0].mxu0 %v1319
        %v1470 = vpop.f32.mrb[0].mxu0
        %v1471 = vadd.f32 0.0, %v1470
        %v1472 = vpop.f32.mrb[0].mxu0
        %1473 = vmatprep.mubr.f32.mxu0 0.0
        %1474 = vmatmul.mubr.f32.gmra.mrb[0].mxu0 %v1322
        %v1475 = vpop.f32.mrb[0].mxu0
        %v1476 = vadd.f32 0.0, %v1475
        %v1477 = vpop.f32.mrb[0].mxu0
        %1478 = vmatprep.mubr.f32.mxu0 0.0
        %1479 = vmatmul.mubr.f32.gmra.mrb[0].mxu0 %v1325
        %v1480 = vpop.f32.mrb[0].mxu0
        %v1481 = vadd.f32 0.0, %v1480
        %v1482 = vpop.f32.mrb[0].mxu0
        %1483 = vmatprep.mubr.f32.mxu0 0.0
        %1484 = vmatmul.mubr.f32.gmra.mrb[0].mxu0 %v1328
        %v1485 = vpop.f32.mrb[0].mxu0
        %v1486 = vadd.f32 0.0, %v1485
        %v1487 = vpop.f32.mrb[0].mxu0
        %1488 = vmatprep.mubr.f32.mxu0 0.0
        %1489 = vmatmul.mubr.f32.gmra.mrb[0].mxu0 %v1331
        %v1490 = vpop.f32.mrb[0].mxu0
        %v1491 = vadd.f32 0.0, %v1490
        %v1492 = vpop.f32.mrb[0].mxu0
        %1493 = vmatprep.mubr.f32.mxu0 0.0
        %1494 = vmatmul.mubr.f32.gmra.mrb[0].mxu0 %v1334
        %v1495 = vpop.f32.mrb[0].mxu0
        %v1496 = vadd.f32 0.0, %v1495
        %v1497 = vpop.f32.mrb[0].mxu0
        %1498 = vmatprep.mubr.f32.mxu0 0.0
        %1499 = vmatmul.mubr.f32.gmra.mrb[0].mxu0 %v1337
        %v1500 = vpop.f32.mrb[0].mxu0
        %v1501 = vadd.f32 0.0, %v1500
        %v1502 = vpop.f32.mrb[0].mxu0
        %1503 = vdwg.mxu0
        %v1504 = vmul.f32 %v1406, %v681
        %v1505 = vmul.f32 %v1411, %v682
        %v1506 = vmul.f32 %v1416, %v683
        %v1507 = vmul.f32 %v1421, %v684
        %v1508 = vmul.f32 %v1426, %v685
        %v1509 = vmul.f32 %v1431, %v686
        %v1510 = vmul.f32 %v1436, %v687
        %v1511 = vmul.f32 %v1441, %v688
        %v1512 = vmul.f32 %v1446, %v689
        %v1513 = vmul.f32 %v1451, %v690
        %v1514 = vmul.f32 %v1456, %v691
        %v1515 = vmul.f32 %v1461, %v692
        %v1516 = vmul.f32 %v1466, %v693
        %v1517 = vmul.f32 %v1471, %v694
        %v1518 = vmul.f32 %v1476, %v695
        %v1519 = vmul.f32 %v1481, %v696
        %v1520 = vmul.f32 %v1486, %v697
        %v1521 = vmul.f32 %v1491, %v698
        %v1522 = vmul.f32 %v1496, %v699
        %v1523 = vmul.f32 %v1501, %v700
        %v1524 = vadd.f32 %v1504, %v1506
        %v1525 = vadd.f32 %v1505, %v1507
        %v1526 = vadd.f32 %v1524, %v1508
        %v1527 = vadd.f32 %v1525, %v1509
        %v1528 = vadd.f32 %v1526, %v1510
        %v1529 = vadd.f32 %v1527, %v1511
        %v1530 = vadd.f32 %v1528, %v1512
        %v1531 = vadd.f32 %v1529, %v1513
        %v1532 = vadd.f32 %v1530, %v1514
        %v1533 = vadd.f32 %v1531, %v1515
        %v1534 = vadd.f32 %v1532, %v1516
        %v1535 = vadd.f32 %v1533, %v1517
        %v1536 = vadd.f32 %v1534, %v1518
        %v1537 = vadd.f32 %v1535, %v1519
        %v1538 = vadd.f32 %v1536, %v1520
        %v1539 = vadd.f32 %v1537, %v1521
        %v1540 = vadd.f32 %v1538, %v1522
        %v1541 = vadd.f32 %v1539, %v1523
        %v1542 = vld [vmem:[%s638] sm:$0xff]
        %v1543 = vld [vmem:[%s638 + $0x8] sm:$0xff]
        %v1544 = vld [vmem:[%s638 + $0x10] sm:$0xff]
        %v1545 = vld [vmem:[%s638 + $0x18] sm:$0xff]
        %v1546 = vld [vmem:[%s638 + $0x20] sm:$0xff]
        %v1547 = vld [vmem:[%s641] sm:$0x1]
        %v1549 = vlaneseq
        %v1550 = vshrl.u32 %v1549, 7
        %v1551 = vsub.s32 0, %v1550
        %v1552 = vrot.slane %v1547, %v1551
        %v1555 = vsel %vm713, %v1540, 0
        %v1558 = vsel %vm713, %v1541, 0
        %1560 = vmatprep.subr.mxu0 0.0
        %1561 = vmatpush1.msra.mxu0 %v1542
        %1562 = vmatprep.subr.mxu0 0.0
        %1563 = vmatpush1.msra.mxu0 %v1543
        %1564 = vmatprep.subr.mxu0 0.0
        %1565 = vmatpush1.msra.mxu0 %v1544
        %1566 = vmatprep.subr.mxu0 0.0
        %1567 = vmatpush1.msra.mxu0 %v1545
        %1568 = vmatprep.subr.mxu0 0.0
        %1569 = vmatpush1.msra.mxu0 %v1546
        %1570 = vmatprep.subr.mxu0 0.0
        %1571 = vmatpush1.msra.mxu0 0.0
        %1572 = vmatprep.subr.mxu0 0.0
        %1573 = vmatpush1.msra.mxu0 0.0
        %1574 = vmatprep.subr.mxu0 0.0
        %1575 = vmatpush1.msra.mxu0 0.0
        %1576 = vmatprep.subr.mxu0 0.0
        %1577 = vmatpush1.msra.mxu0 0.0
        %1578 = vmatprep.subr.mxu0 0.0
        %1579 = vmatpush1.msra.mxu0 0.0
        %1580 = vmatprep.subr.mxu0 0.0
        %1581 = vmatpush1.msra.mxu0 0.0
        %1582 = vmatprep.subr.mxu0 0.0
        %1583 = vmatpush1.msra.mxu0 0.0
        %1584 = vmatprep.subr.mxu0 0.0
        %1585 = vmatpush1.msra.mxu0 0.0
        %1586 = vmatprep.subr.mxu0 0.0
        %1587 = vmatpush1.msra.mxu0 0.0
        %1588 = vmatprep.subr.mxu0 0.0
        %1589 = vmatpush1.msra.mxu0 0.0
        %1590 = vmatprep.subr.mxu0 0.0
        %1591 = vmatpush1.msra.mxu0 0.0
        %1592 = vmatprep.subr.mxu0 0.0
        %1593 = vmatpush1.msra.mxu0 0.0
        %1594 = vmatprep.subr.mxu0 0.0
        %1595 = vmatpush1.msra.mxu0 0.0
        %1596 = vmatprep.subr.mxu0 0.0
        %1597 = vmatpush1.msra.mxu0 0.0
        %1598 = vmatprep.subr.mxu0 0.0
        %1599 = vmatpush1.msra.mxu0 0.0
        %1600 = vmatprep.subr.mxu0 0.0
        %1601 = vmatpush1.msra.mxu0 0.0
        %1602 = vmatprep.subr.mxu0 0.0
        %1603 = vmatpush1.msra.mxu0 0.0
        %1604 = vmatprep.subr.mxu0 0.0
        %1605 = vmatpush1.msra.mxu0 0.0
        %1606 = vmatprep.subr.mxu0 0.0
        %1607 = vmatpush1.msra.mxu0 0.0
        %1608 = vmatprep.subr.mxu0 0.0
        %1609 = vmatpush1.msra.mxu0 0.0
        %1610 = vmatprep.subr.mxu0 0.0
        %1611 = vmatpush1.msra.mxu0 0.0
        %1612 = vmatprep.subr.mxu0 0.0
        %1613 = vmatpush1.msra.mxu0 0.0
        %1614 = vmatprep.subr.mxu0 0.0
        %1615 = vmatpush1.msra.mxu0 0.0
        %1616 = vmatprep.subr.mxu0 0.0
        %1617 = vmatpush1.msra.mxu0 0.0
        %1618 = vmatprep.subr.mxu0 0.0
        %1619 = vmatpush1.msra.mxu0 0.0
        %1620 = vmatprep.subr.mxu0 0.0
        %1621 = vmatpush1.msra.mxu0 0.0
        %1622 = vmatprep.subr.mxu0 0.0
        %1623 = vmatpush1.msra.mxu0 0.0
        %1624 = vmatprep.mubr.f32.mxu0 0.0
        %1625 = vmatmul.mubr.f32.gmra.mrb[0].mxu0 %v1555
        %v1626 = vpop.f32.mrb[0].mxu0
        %v1627 = vadd.f32 %v1552, %v1626
        %v1628 = vpop.f32.mrb[0].mxu0
        %1629 = vmatprep.mubr.f32.mxu0 0.0
        %1630 = vmatmul.mubr.f32.gmra.mrb[0].mxu0 %v1558
        %v1631 = vpop.f32.mrb[0].mxu0
        %v1632 = vadd.f32 %v1552, %v1631
        %v1633 = vpop.f32.mrb[0].mxu0
        %1634 = vdwg.mxu0
        %v1635 = vadd.f32 %v679, %v1627
        %v1636 = vadd.f32 %v680, %v1632
        %v1637 = vld [vmem:[%s644] sm:$0x1]
        %v1638 = vld [vmem:[%s647] sm:$0x1]
        %v1639 = vsel %vm713, %v1635, 0.0
        %1640 = vadd.xlane.f32.xlu0 %v1639
        %v1641 = vpop.xlane.xlu0 %1640
        %v1642 = vsel %vm713, %v1636, 0.0
        %1643 = vadd.xlane.f32.xlu0 %v1642
        %v1644 = vpop.xlane.xlu0 %1643
        %v1645 = vrcp.pop 40.0
        %v1646 = vmul.f32 %v1641, %v1645
        %v1647 = vmul.f32 %v1644, %v1645
        %v1648 = vsub.f32 %v1635, %v1646
        %v1649 = vsub.f32 %v1636, %v1647
        %v1650 = vmul.f32 %v1648, %v1648
        %v1651 = vmul.f32 %v1649, %v1649
        %v1652 = vsel %vm713, %v1650, 0.0
        %1653 = vadd.xlane.f32.xlu0 %v1652
        %v1654 = vpop.xlane.xlu0 %1653
        %v1655 = vsel %vm713, %v1651, 0.0
        %1656 = vadd.xlane.f32.xlu0 %v1655
        %v1657 = vpop.xlane.xlu0 %1656
        %v1658 = vmul.f32 %v1654, %v1645
        %v1659 = vmul.f32 %v1657, %v1645
        %v1660 = vadd.f32 %v1658, 1e-05
        %v1661 = vadd.f32 %v1659, 1e-05
        %v1662 = vrsqrt.pop %v1660
        %v1663 = vrsqrt.pop %v1661
        %v1664 = vmul.f32 %v1648, %v1662
        %v1665 = vmul.f32 %v1649, %v1663
        %v1667 = vlaneseq
        %v1668 = vshrl.u32 %v1667, 7
        %v1669 = vsub.s32 0, %v1668
        %v1670 = vrot.slane %v1637, %v1669
        %v1672 = vmul.f32 %v1664, %v1670
        %v1673 = vmul.f32 %v1665, %v1670
        %v1675 = vlaneseq
        %v1676 = vshrl.u32 %v1675, 7
        %v1677 = vsub.s32 0, %v1676
        %v1678 = vrot.slane %v1638, %v1677
        %v1680 = vadd.f32 %v1672, %v1678
        %v1681 = vadd.f32 %v1673, %v1678
        %v1682 = vld [vmem:[%s652] sm:$0xff]
        %v1683 = vld [vmem:[%s652 + $0x8] sm:$0xff]
        %v1684 = vld [vmem:[%s652 + $0x10] sm:$0xff]
        %v1685 = vld [vmem:[%s652 + $0x18] sm:$0xff]
        %v1686 = vld [vmem:[%s652 + $0x20] sm:$0xff]
        %v1687 = vld [vmem:[%s655] sm:$0x1]
        %v1689 = vlaneseq
        %v1690 = vshrl.u32 %v1689, 7
        %v1691 = vsub.s32 0, %v1690
        %v1692 = vrot.slane %v1687, %v1691
        %v1695 = vsel %vm713, %v1680, 0
        %v1698 = vsel %vm713, %v1681, 0
        %1700 = vmatprep.subr.mxu0 0.0
        %1701 = vmatpush1.msra.mxu0 %v1682
        %1702 = vmatprep.subr.mxu0 0.0
        %1703 = vmatpush1.msra.mxu0 %v1683
        %1704 = vmatprep.subr.mxu0 0.0
        %1705 = vmatpush1.msra.mxu0 %v1684
        %1706 = vmatprep.subr.mxu0 0.0
        %1707 = vmatpush1.msra.mxu0 %v1685
        %1708 = vmatprep.subr.mxu0 0.0
        %1709 = vmatpush1.msra.mxu0 %v1686
        %1710 = vmatprep.subr.mxu0 0.0
        %1711 = vmatpush1.msra.mxu0 0.0
        %1712 = vmatprep.subr.mxu0 0.0
        %1713 = vmatpush1.msra.mxu0 0.0
        %1714 = vmatprep.subr.mxu0 0.0
        %1715 = vmatpush1.msra.mxu0 0.0
        %1716 = vmatprep.subr.mxu0 0.0
        %1717 = vmatpush1.msra.mxu0 0.0
        %1718 = vmatprep.subr.mxu0 0.0
        %1719 = vmatpush1.msra.mxu0 0.0
        %1720 = vmatprep.subr.mxu0 0.0
        %1721 = vmatpush1.msra.mxu0 0.0
        %1722 = vmatprep.subr.mxu0 0.0
        %1723 = vmatpush1.msra.mxu0 0.0
        %1724 = vmatprep.subr.mxu0 0.0
        %1725 = vmatpush1.msra.mxu0 0.0
        %1726 = vmatprep.subr.mxu0 0.0
        %1727 = vmatpush1.msra.mxu0 0.0
        %1728 = vmatprep.subr.mxu0 0.0
        %1729 = vmatpush1.msra.mxu0 0.0
        %1730 = vmatprep.subr.mxu0 0.0
        %1731 = vmatpush1.msra.mxu0 0.0
        %1732 = vmatprep.subr.mxu0 0.0
        %1733 = vmatpush1.msra.mxu0 0.0
        %1734 = vmatprep.subr.mxu0 0.0
        %1735 = vmatpush1.msra.mxu0 0.0
        %1736 = vmatprep.subr.mxu0 0.0
        %1737 = vmatpush1.msra.mxu0 0.0
        %1738 = vmatprep.subr.mxu0 0.0
        %1739 = vmatpush1.msra.mxu0 0.0
        %1740 = vmatprep.subr.mxu0 0.0
        %1741 = vmatpush1.msra.mxu0 0.0
        %1742 = vmatprep.subr.mxu0 0.0
        %1743 = vmatpush1.msra.mxu0 0.0
        %1744 = vmatprep.subr.mxu0 0.0
        %1745 = vmatpush1.msra.mxu0 0.0
        %1746 = vmatprep.subr.mxu0 0.0
        %1747 = vmatpush1.msra.mxu0 0.0
        %1748 = vmatprep.subr.mxu0 0.0
        %1749 = vmatpush1.msra.mxu0 0.0
        %1750 = vmatprep.subr.mxu0 0.0
        %1751 = vmatpush1.msra.mxu0 0.0
        %1752 = vmatprep.subr.mxu0 0.0
        %1753 = vmatpush1.msra.mxu0 0.0
        %1754 = vmatprep.subr.mxu0 0.0
        %1755 = vmatpush1.msra.mxu0 0.0
        %1756 = vmatprep.subr.mxu0 0.0
        %1757 = vmatpush1.msra.mxu0 0.0
        %1758 = vmatprep.subr.mxu0 0.0
        %1759 = vmatpush1.msra.mxu0 0.0
        %1760 = vmatprep.subr.mxu0 0.0
        %1761 = vmatpush1.msra.mxu0 0.0
        %1762 = vmatprep.subr.mxu0 0.0
        %1763 = vmatpush1.msra.mxu0 0.0
        %1764 = vmatprep.mubr.f32.mxu0 0.0
        %1765 = vmatmul.mubr.f32.gmra.mrb[0].mxu0 %v1695
        %v1766 = vpop.f32.mrb[0].mxu0
        %v1767 = vadd.f32 %v1692, %v1766
        %v1768 = vpop.f32.mrb[0].mxu0
        %1769 = vmatprep.mubr.f32.mxu0 0.0
        %1770 = vmatmul.mubr.f32.gmra.mrb[0].mxu0 %v1698
        %v1771 = vpop.f32.mrb[0].mxu0
        %v1772 = vadd.f32 %v1692, %v1771
        %v1773 = vpop.f32.mrb[0].mxu0
        %1774 = vdwg.mxu0
        %vm1775 = vcmp.gt.f32.partialorder %v1767, 0.0
        %vm1776 = vcmp.gt.f32.partialorder %v1772, 0.0
        %v1777 = vmin.f32 %v1767, 0.0
        %v1778 = vmin.f32 %v1772, 0.0
        %v1779 = vmul.f32 %v1777, 1.442695
        %v1780 = vpow.pop %v1779
        %v1781 = vmul.f32 %v1778, 1.442695
        %v1782 = vpow.pop %v1781
        %v1783 = vsub.f32 %v1780, 1.0
        %v1784 = vsub.f32 %v1782, 1.0
        %v1785 = vsel %vm1775, %v1767, %v1783
        %v1786 = vsel %vm1776, %v1772, %v1784
        %v1787 = vld [vmem:[%s660] sm:$0xff]
        %v1788 = vld [vmem:[%s660 + $0x8] sm:$0xff]
        %v1789 = vld [vmem:[%s660 + $0x10] sm:$0xff]
        %v1790 = vld [vmem:[%s660 + $0x18] sm:$0xff]
        %v1791 = vld [vmem:[%s660 + $0x20] sm:$0xff]
        %v1792 = vld [vmem:[%s660 + $0x28] sm:$0xff]
        %v1793 = vld [vmem:[%s660 + $0x30] sm:$0xff]
        %v1794 = vld [vmem:[%s660 + $0x38] sm:$0xff]
        %v1795 = vld [vmem:[%s660 + $0x40] sm:$0xff]
        %v1796 = vld [vmem:[%s660 + $0x48] sm:$0xff]
        %v1797 = vld [vmem:[%s660 + $0x50] sm:$0xff]
        %v1798 = vld [vmem:[%s660 + $0x58] sm:$0xff]
        %v1799 = vld [vmem:[%s660 + $0x60] sm:$0xff]
        %v1800 = vld [vmem:[%s660 + $0x68] sm:$0xff]
        %v1801 = vld [vmem:[%s660 + $0x70] sm:$0xff]
        %v1802 = vld [vmem:[%s660 + $0x78] sm:$0xff]
        %v1803 = vld [vmem:[%s663] sm:$0x1]
        %v1805 = vlaneseq
        %v1806 = vshrl.u32 %v1805, 7
        %v1807 = vsub.s32 0, %v1806
        %v1808 = vrot.slane %v1803, %v1807
        %1810 = vmatprep.subr.mxu0 0.0
        %1811 = vmatpush1.msra.mxu0 %v1787
        %1812 = vmatprep.subr.mxu0 0.0
        %1813 = vmatpush1.msra.mxu0 %v1788
        %1814 = vmatprep.subr.mxu0 0.0
        %1815 = vmatpush1.msra.mxu0 %v1789
        %1816 = vmatprep.subr.mxu0 0.0
        %1817 = vmatpush1.msra.mxu0 %v1790
        %1818 = vmatprep.subr.mxu0 0.0
        %1819 = vmatpush1.msra.mxu0 %v1791
        %1820 = vmatprep.subr.mxu0 0.0
        %1821 = vmatpush1.msra.mxu0 %v1792
        %1822 = vmatprep.subr.mxu0 0.0
        %1823 = vmatpush1.msra.mxu0 %v1793
        %1824 = vmatprep.subr.mxu0 0.0
        %1825 = vmatpush1.msra.mxu0 %v1794
        %1826 = vmatprep.subr.mxu0 0.0
        %1827 = vmatpush1.msra.mxu0 %v1795
        %1828 = vmatprep.subr.mxu0 0.0
        %1829 = vmatpush1.msra.mxu0 %v1796
        %1830 = vmatprep.subr.mxu0 0.0
        %1831 = vmatpush1.msra.mxu0 %v1797
        %1832 = vmatprep.subr.mxu0 0.0
        %1833 = vmatpush1.msra.mxu0 %v1798
        %1834 = vmatprep.subr.mxu0 0.0
        %1835 = vmatpush1.msra.mxu0 %v1799
        %1836 = vmatprep.subr.mxu0 0.0
        %1837 = vmatpush1.msra.mxu0 %v1800
        %1838 = vmatprep.subr.mxu0 0.0
        %1839 = vmatpush1.msra.mxu0 %v1801
        %1840 = vmatprep.subr.mxu0 0.0
        %1841 = vmatpush1.msra.mxu0 %v1802
        %1842 = vmatprep.subr.mxu0 0.0
        %1843 = vmatpush1.msra.mxu0 0.0
        %1844 = vmatprep.subr.mxu0 0.0
        %1845 = vmatpush1.msra.mxu0 0.0
        %1846 = vmatprep.subr.mxu0 0.0
        %1847 = vmatpush1.msra.mxu0 0.0
        %1848 = vmatprep.subr.mxu0 0.0
        %1849 = vmatpush1.msra.mxu0 0.0
        %1850 = vmatprep.subr.mxu0 0.0
        %1851 = vmatpush1.msra.mxu0 0.0
        %1852 = vmatprep.subr.mxu0 0.0
        %1853 = vmatpush1.msra.mxu0 0.0
        %1854 = vmatprep.subr.mxu0 0.0
        %1855 = vmatpush1.msra.mxu0 0.0
        %1856 = vmatprep.subr.mxu0 0.0
        %1857 = vmatpush1.msra.mxu0 0.0
        %1858 = vmatprep.subr.mxu0 0.0
        %1859 = vmatpush1.msra.mxu0 0.0
        %1860 = vmatprep.subr.mxu0 0.0
        %1861 = vmatpush1.msra.mxu0 0.0
        %1862 = vmatprep.subr.mxu0 0.0
        %1863 = vmatpush1.msra.mxu0 0.0
        %1864 = vmatprep.subr.mxu0 0.0
        %1865 = vmatpush1.msra.mxu0 0.0
        %1866 = vmatprep.subr.mxu0 0.0
        %1867 = vmatpush1.msra.mxu0 0.0
        %1868 = vmatprep.subr.mxu0 0.0
        %1869 = vmatpush1.msra.mxu0 0.0
        %1870 = vmatprep.subr.mxu0 0.0
        %1871 = vmatpush1.msra.mxu0 0.0
        %1872 = vmatprep.subr.mxu0 0.0
        %1873 = vmatpush1.msra.mxu0 0.0
        %1874 = vmatprep.mubr.f32.mxu0 0.0
        %1875 = vmatmul.mubr.f32.gmra.mrb[0].mxu0 %v1785
        %v1876 = vpop.f32.mrb[0].mxu0
        %v1877 = vadd.f32 %v1808, %v1876
        %v1878 = vpop.f32.mrb[0].mxu0
        %1879 = vmatprep.mubr.f32.mxu0 0.0
        %1880 = vmatmul.mubr.f32.gmra.mrb[0].mxu0 %v1786
        %v1881 = vpop.f32.mrb[0].mxu0
        %v1882 = vadd.f32 %v1808, %v1881
        %v1883 = vpop.f32.mrb[0].mxu0
        %1884 = vdwg.mxu0
        %v1885 = vadd.f32 %v1680, %v1877
        %v1886 = vadd.f32 %v1681, %v1882
        %v1887 = vld [vmem:[%s666] sm:$0x1]
        %v1888 = vld [vmem:[%s669] sm:$0x1]
        %v1889 = vsel %vm713, %v1885, 0.0
        %1890 = vadd.xlane.f32.xlu0 %v1889
        %v1891 = vpop.xlane.xlu0 %1890
        %v1892 = vsel %vm713, %v1886, 0.0
        %1893 = vadd.xlane.f32.xlu0 %v1892
        %v1894 = vpop.xlane.xlu0 %1893
        %v1895 = vmul.f32 %v1891, %v1645
        %v1896 = vmul.f32 %v1894, %v1645
        %v1897 = vsub.f32 %v1885, %v1895
        %v1898 = vsub.f32 %v1886, %v1896
        %v1899 = vmul.f32 %v1897, %v1897
        %v1900 = vmul.f32 %v1898, %v1898
        %v1901 = vsel %vm713, %v1899, 0.0
        %1902 = vadd.xlane.f32.xlu0 %v1901
        %v1903 = vpop.xlane.xlu0 %1902
        %v1904 = vsel %vm713, %v1900, 0.0
        %1905 = vadd.xlane.f32.xlu0 %v1904
        %v1906 = vpop.xlane.xlu0 %1905
        %v1907 = vmul.f32 %v1903, %v1645
        %v1908 = vmul.f32 %v1906, %v1645
        %v1909 = vadd.f32 %v1907, 1e-05
        %v1910 = vadd.f32 %v1908, 1e-05
        %v1911 = vrsqrt.pop %v1909
        %v1912 = vrsqrt.pop %v1910
        %v1913 = vmul.f32 %v1897, %v1911
        %v1914 = vmul.f32 %v1898, %v1912
        %v1916 = vlaneseq
        %v1917 = vshrl.u32 %v1916, 7
        %v1918 = vsub.s32 0, %v1917
        %v1919 = vrot.slane %v1887, %v1918
        %v1921 = vmul.f32 %v1913, %v1919
        %v1922 = vmul.f32 %v1914, %v1919
        %v1924 = vlaneseq
        %v1925 = vshrl.u32 %v1924, 7
        %v1926 = vsub.s32 0, %v1925
        %v1927 = vrot.slane %v1888, %v1926
        %v1929 = vadd.f32 %v1921, %v1927
        %v1930 = vadd.f32 %v1922, %v1927
        %1931 = vst.msk [vmem:[#allocation2] sm:$0xff] %vm713, %v1929
        %1932 = vst.msk [vmem:[#allocation2 + $0x8] sm:$0xff] %vm713, %v1930
        %p1933 = scmp.eq.s32.totalorder %s33, 5
        // Predicated region
        $region81: #{tpu_custom_call.1} parent=75 // pred_check
          %p1934 = pneg %p1933
        $region82: #{tpu_custom_call.1} parent=75 // pred_check_branch
          %1936 = sbr.rel (%p1934) target = $region84
        $region83: #{tpu_custom_call.1} parent=75 // pred_region
          %1937 = vst.msk [vmem:[%s620] sm:$0xff] %vm713, %v1929
          %1938 = vst.msk [vmem:[%s620 + $0x8] sm:$0xff] %vm713, %v1930
        $region84: #{tpu_custom_call.1} parent=75 // pred_fallthru
          _
        %s1939 = sand.u32 %s407, 1
        %s1940 = scalar_lea.sflag [#allocation4], %s1939
        %s1941 = sand.u32 %s407, 1
        %s1942 = smul.addr %s1941, 16
        %s1943 = scalar_lea.vmem [#allocation3], %s1942
        // Predicated region
        $region85: #{tpu_custom_call.1} parent=75 // pred_check
          %p1944 = pneg %p417
        $region86: #{tpu_custom_call.1} parent=75 // pred_check_branch
          %1946 = sbr.rel (%p1944) target = $region88
        $region87: #{tpu_custom_call.1} parent=75 // pred_region
          %s1948 = ssub.s32 256, 256
          %1949 = vsyncadd %s1940, %s1948
          %s1950 = smul.addr %s32, 2
          %s1951 = smul.addr %s1950, 128
          %s1952 = scalar_lea.hbm %s14, %s1951
          %s1953 = sshll.u32 %s1943, 4
          %s1954 = int_to_ptr.vmem [resolvable:$true] %s1953
          %1959 = dma.vmem_to_hbm [thread:$0]  %s1954, 256, %s1952, %s1940, 128, 128, 8
        $region88: #{tpu_custom_call.1} parent=75 // pred_fallthru
          _
      $region76: #{tpu_custom_call.1} parent=5 // pred_fallthru
        _
      %p1960 = scmp.le.s32.totalorder 2, %s23
      // Predicated region
      $region89: #{tpu_custom_call.1} parent=5 // pred_check
        %p1961 = pneg %p1960
      $region90: #{tpu_custom_call.1} parent=5 // pred_check_branch
        %1963 = sbr.rel (%p1961) target = $region92
      $region91: #{tpu_custom_call.1} parent=5 // pred_region
        %s1964 = ssub.s32 %s23, 2
        // Predicated region
        $region93: #{tpu_custom_call.1} parent=91 // pred_check
          %p1965 = pneg %p423
        $region94: #{tpu_custom_call.1} parent=91 // pred_check_branch
          %1967 = sbr.rel (%p1965) target = $region96
        $region95: #{tpu_custom_call.1} parent=91 // pred_region
          %s1968 = sand.u32 %s408, 1
          %s1969 = scalar_lea.sflag [#allocation4], %s1968
          %s1970 = sand.u32 %s408, 1
          %s1971 = smul.addr %s1970, 16
          %s1972 = scalar_lea.vmem [#allocation3], %s1971
          %1973 = dma.done %s1969, 256
        $region96: #{tpu_custom_call.1} parent=91 // pred_fallthru
          _
      $region92: #{tpu_custom_call.1} parent=5 // pred_fallthru
        _
    $region6: #{tpu_custom_call.1} parent=1 // loop_footer
      %s27 = sadd.s32 1, %s23
    $region7: #{tpu_custom_call.1} parent=1 // loop_footer_branch
      %22 = sbr.rel target = $region3
    $region8: #{tpu_custom_call.1} parent=1 // loop_exit
      _
    %1974 = vsyncpa [#allocation4], 1
    %s1975 = scalar_lea.sflag [#allocation4], 1
    %1976 = vsyncpa %s1975, 1

</llo_original>
